<compile_context>
chip_gen: v6e
topology: v6e:2x2x1
jax: 0.10.0
libtpu: 0.0.40
codegen_flags: <defaults>
</compile_context>

<pallas_src>
import math
import numpy as np
import jax
import jax.numpy as jnp
from jax.experimental import pallas as pl
from jax.experimental.pallas import tpu as pltpu

# ---- module hyper-parameters (NSF_AR defaults: K=5, B=3, hidden_dim=8) ----
DIM = 8
HIDDEN = 8
BATCH = 8
K = 5
TAIL = 3.0                      # tail_bound B
NOUT = 3 * K - 1                # 14 spline params per ordinate
H_TOT = DIM * HIDDEN            # 64 packed hidden units
MIN_W = 1e-3                    # DEFAULT_MIN_BIN_WIDTH
MIN_H = 1e-3                    # DEFAULT_MIN_BIN_HEIGHT
MIN_D = 1e-3                    # DEFAULT_MIN_DERIVATIVE
SEARCH_EPS = 1e-6
# boundary derivative = min_d + softplus(log(exp(1-min_d)-1)) == 1.0
BOUNDARY_DERIV = MIN_D + math.log1p(math.exp(math.log(math.exp(1.0 - MIN_D) - 1.0)))


# ------------------------- in-kernel helpers -------------------------------
def _softplus(v):
    # numerically stable, uses only exp/log/abs/max (all Mosaic-supported)
    return jnp.maximum(v, 0.0) + jnp.log(1.0 + jnp.exp(-jnp.abs(v)))


def _recip(v):
    """EUP approximate reciprocal + one Newton step (~f32 accuracy)."""
    r = pl.reciprocal(v, approx=True)
    return r * (2.0 - v * r)


def _softmax_planes(planes):
    """Softmax across a python list of (B, D) planes (the K bin axis)."""
    m = planes[0]
    for p in planes[1:]:
        m = jnp.maximum(m, p)
    es = [jnp.exp(p - m) for p in planes]
    s = es[0]
    for e in es[1:]:
        s = s + e
    inv = _recip(s)
    return [e * inv for e in es]


def _split_bf16(a):
    hi = a.astype(jnp.bfloat16)
    lo = (a - hi.astype(jnp.float32)).astype(jnp.bfloat16)
    return hi, lo


def _dot3(a, b):
    """f32 matmul as 3 native bf16 MXU passes (== Precision.HIGH / bf16x3)."""
    ah, al = _split_bf16(a)
    bh, bl = _split_bf16(b)
    d = lambda u, v: jnp.dot(u, v, preferred_element_type=jnp.float32)
    return d(ah, bh) + d(ah, bl) + d(al, bh)


# ------------------------------ kernel --------------------------------------
def nsf_ar_fwd_kernel(x_ref, w123_ref, w4_ref, b_ref, z_ref, ld_ref):
    x = x_ref[...]                                    # (B, D) f32
    nb = x.shape[1]                                   # D ordinates == #blocks

    # --- packed weight / bias slices (all static, sublane-aligned rows) ----
    w1 = w123_ref[:DIM, :]                            # (D,   D*H)
    w2 = w123_ref[DIM:DIM + H_TOT, :]                 # (D*H, D*H)
    w3 = w123_ref[DIM + H_TOT:DIM + 2 * H_TOT, :]     # (D*H, D*H)
    b1 = b_ref[0:1, :H_TOT]
    b2 = b_ref[1:2, :H_TOT]
    b3 = b_ref[2:3, :H_TOT]
    b4 = b_ref[3:4, :]                                # (1, NOUT*D)

    # --- all conditioners fused: 4 (bf16x3) matmuls + 3 tanh ---------------
    h = jnp.tanh(_dot3(x, w1) + b1)
    h = jnp.tanh(_dot3(h, w2) + b2)
    h = jnp.tanh(_dot3(h, w3) + b3)
    out = _dot3(h, w4_ref[...]) + b4                  # (B, NOUT*D)

    # component-major packing: columns [c*D, (c+1)*D) = component c, all ordinates
    plane = lambda c: out[:, c * nb:(c + 1) * nb]     # (B, D) contiguous slice
    w_raw = [plane(c) for c in range(K)]
    h_raw = [plane(K + c) for c in range(K)]
    d_raw = [plane(2 * K + c) for c in range(K - 1)]

    # --- NSF_AR.forward parameter transforms (double softmax is per spec) --
    two_b = 2.0 * TAIL
    w_u = [two_b * p for p in _softmax_planes(w_raw)]
    h_u = [two_b * p for p in _softmax_planes(h_raw)]
    d_u = [_softplus(p) for p in d_raw]

    left, right = -TAIL, TAIL
    scale = right - left

    def knots_from(unnorm, min_bin):
        sm = _softmax_planes(unnorm)                  # softmax inside RQS
        adj = [min_bin + (1.0 - min_bin * K) * p for p in sm]
        knots = [jnp.full_like(x, left)]
        run = jnp.zeros_like(x)
        for j in range(K - 1):
            run = run + adj[j]
            knots.append(scale * run + left)
        knots.append(jnp.full_like(x, right))         # endpoints pinned exactly
        bins = [knots[j + 1] - knots[j] for j in range(K)]
        return knots, bins

    kw, bw = knots_from(w_u, MIN_W)                   # width knots / bin widths
    kh, bh = knots_from(h_u, MIN_H)                   # height knots / bin heights

    bnd = jnp.full_like(x, BOUNDARY_DERIV)
    derivs = [bnd] + [MIN_D + _softplus(p) for p in d_u] + [bnd]   # K+1 planes

    # --- fused searchsorted + gather (interval select, no float equality) --
    x_in = jnp.clip(x, left, right)
    zero = jnp.zeros_like(x)
    in_cw = zero; in_bw = zero; in_ch = zero; in_bh = zero
    in_d = zero; in_dp1 = zero
    for j in range(K):
        hi_knot = (kw[j + 1] + SEARCH_EPS) if j == K - 1 else kw[j + 1]
        sel = ((x_in >= kw[j]) & (x_in < hi_knot)).astype(jnp.float32)
        in_cw = in_cw + sel * kw[j]
        in_bw = in_bw + sel * bw[j]
        in_ch = in_ch + sel * kh[j]
        in_bh = in_bh + sel * bh[j]
        in_d = in_d + sel * derivs[j]
        in_dp1 = in_dp1 + sel * derivs[j + 1]

    # --- rational quadratic spline, forward branch --------------------------
    inv_bw = _recip(in_bw)                            # shared by delta & theta
    in_delta = in_bh * inv_bw
    theta = (x_in - in_cw) * inv_bw
    om = 1.0 - theta
    t1mt = theta * om
    th2 = theta * theta
    numer = in_bh * (in_delta * th2 + in_d * t1mt)
    denom = in_delta + (in_d + in_dp1 - 2.0 * in_delta) * t1mt
    inv_denom = _recip(denom)                         # shared by z & log|det|
    z_spline = in_ch + numer * inv_denom
    dnum = (in_delta * in_delta) * (in_dp1 * th2 + 2.0 * in_delta * t1mt
                                    + in_d * om * om)
    lad = jnp.log(dnum * (inv_denom * inv_denom))     # one log instead of two

    # --- unconstrained tails: identity outside [-B, B] ----------------------
    inside = (x >= left) & (x <= right)
    z = jnp.where(inside, z_spline, x)
    ld_e = jnp.where(inside, lad, 0.0)

    z_ref[...] = z                                          # single dense store
    ld_ref[...] = jnp.sum(ld_e, axis=-1, keepdims=True)     # written once


# ------------------------------ wrapper --------------------------------------
def nsf_ar_forward(x, W123p, W4p, Bp):
    Bt, Dd = x.shape
    Hp = W4p.shape[0]                                  # packed hidden width D*H
    # 3 bf16 passes per fused matmul
    flops = 2 * 3 * Bt * (Dd * Hp + 2 * Hp * Hp + Hp * (NOUT * Dd)) \
        + 300 * Bt * Dd
    trans = 3 * Bt * Hp + Bt * Dd * (4 * K + 2 * (K - 1) + 8)
    nbytes = 4 * (x.size + W123p.size + W4p.size + Bp.size + Bt * Dd + Bt)

    vmem = lambda: pl.BlockSpec(memory_space=pltpu.MemorySpace.VMEM)
    z, ld = pl.pallas_call(
        nsf_ar_fwd_kernel,
        out_shape=(jax.ShapeDtypeStruct((Bt, Dd), jnp.float32),
                   jax.ShapeDtypeStruct((Bt, 1), jnp.float32)),
        in_specs=[vmem() for _ in range(4)],
        out_specs=(vmem(), vmem()),
        cost_estimate=pl.CostEstimate(flops=int(flops), transcendentals=int(trans),
                                      bytes_accessed=int(nbytes)),
    )(x, W123p, W4p, Bp)
    return z, ld[:, 0]


# --------------------- host-side parameter construction ----------------------
def init_params(key):
    """PyTorch-Linear-style deterministic init: per-ordinate FCNN(i, 14, 8)."""
    k_init, k_layers = jax.random.split(key)
    init_param = np.asarray(jax.random.uniform(
        k_init, (NOUT,), jnp.float32, minval=-0.5, maxval=0.5))

    def u(k, shape, b):
        return np.asarray(jax.random.uniform(k, shape, jnp.float32,
                                             minval=-b, maxval=b))

    layers = []
    for i in range(1, DIM):
        ks = jax.random.split(jax.random.fold_in(k_layers, i), 8)
        b_in = 1.0 / math.sqrt(i)
        b_h = 1.0 / math.sqrt(HIDDEN)
        layers.append(dict(
            W1=u(ks[0], (i, HIDDEN), b_in), b1=u(ks[1], (HIDDEN,), b_in),
            W2=u(ks[2], (HIDDEN, HIDDEN), b_h), b2=u(ks[3], (HIDDEN,), b_h),
            W3=u(ks[4], (HIDDEN, HIDDEN), b_h), b3=u(ks[5], (HIDDEN,), b_h),
            W4=u(ks[6], (HIDDEN, NOUT), b_h), b4=u(ks[7], (NOUT,), b_h)))
    return init_param, layers


def pack_params(init_param, layers):
    """Block-diagonal packing of all conditioners (+ pseudo-block 0 = init_param).

    Block i (ordinate i) owns hidden rows [i*H, (i+1)*H).  W1 blocks are
    zero-padded on the input dim so x @ W1_block_i == x[:, :i] @ W1_i.
    W4 is packed component-major (column c*DIM + i) so each spline parameter
    is a contiguous (B, DIM) lane slice of the fused output.  Block 0 has all
    zero weights; its output equals its bias, which carries init_param.
    W1/W2/W3 are stacked into one (D + 2*D*H, D*H) buffer and the four biases
    into one (4, NOUT*D) buffer to minimize the number of per-call DMAs.
    """
    nb, Hh = DIM, HIDDEN
    W1p = np.zeros((DIM, H_TOT), np.float32)
    W2p = np.zeros((H_TOT, H_TOT), np.float32)
    W3p = np.zeros((H_TOT, H_TOT), np.float32)
    W4p = np.zeros((H_TOT, NOUT * nb), np.float32)
    Bp = np.zeros((4, NOUT * nb), np.float32)   # rows: b1, b2, b3 (cols :64), b4

    for c in range(NOUT):                       # pseudo block 0 -> init_param
        Bp[3, c * nb + 0] = init_param[c]

    for i in range(1, DIM):
        L = layers[i - 1]
        r0 = i * Hh
        W1p[:i, r0:r0 + Hh] = L["W1"]
        Bp[0, r0:r0 + Hh] = L["b1"]
        W2p[r0:r0 + Hh, r0:r0 + Hh] = L["W2"]
        Bp[1, r0:r0 + Hh] = L["b2"]
        W3p[r0:r0 + Hh, r0:r0 + Hh] = L["W3"]
        Bp[2, r0:r0 + Hh] = L["b3"]
        for c in range(NOUT):
            W4p[r0:r0 + Hh, c * nb + i] = L["W4"][:, c]
            Bp[3, c * nb + i] = L["b4"][c]

    W123p = np.concatenate([W1p, W2p, W3p], axis=0)     # (8 + 64 + 64, 64)
    return W123p, W4p, Bp


# --------------------------- NumPy float64 reference -------------------------
def _softmax_np(v):
    m = v.max(axis=-1, keepdims=True)
    e = np.exp(v - m)
    return e / e.sum(axis=-1, keepdims=True)


def _softplus_np(v):
    return np.logaddexp(0.0, v)


def _rqs_fwd_np(inputs, un_w, un_h, un_d, left, right, bottom, top):
    nbins = un_w.shape[-1]
    widths = MIN_W + (1 - MIN_W * nbins) * _softmax_np(un_w)
    cumw = np.concatenate([np.zeros((widths.shape[0], 1)),
                           np.cumsum(widths, axis=-1)], axis=-1)
    cumw = (right - left) * cumw + left
    cumw[:, 0] = left; cumw[:, -1] = right
    widths = cumw[:, 1:] - cumw[:, :-1]

    derivs = MIN_D + _softplus_np(un_d)

    heights = MIN_H + (1 - MIN_H * nbins) * _softmax_np(un_h)
    cumh = np.concatenate([np.zeros((heights.shape[0], 1)),
                           np.cumsum(heights, axis=-1)], axis=-1)
    cumh = (top - bottom) * cumh + bottom
    cumh[:, 0] = bottom; cumh[:, -1] = top
    heights = cumh[:, 1:] - cumh[:, :-1]

    locs = cumw.copy(); locs[:, -1] += SEARCH_EPS
    bin_idx = np.clip(np.sum(inputs[:, None] >= locs, axis=-1) - 1, 0, nbins - 1)
    ar = np.arange(inputs.shape[0])

    in_cw, in_bw = cumw[ar, bin_idx], widths[ar, bin_idx]
    in_ch, in_bh = cumh[ar, bin_idx], heights[ar, bin_idx]
    in_delta = (heights / widths)[ar, bin_idx]
    in_d, in_dp1 = derivs[ar, bin_idx], derivs[ar, bin_idx + 1]

    theta = (inputs - in_cw) / in_bw
    t1mt = theta * (1 - theta)
    numer = in_bh * (in_delta * theta ** 2 + in_d * t1mt)
    denom = in_delta + (in_d + in_dp1 - 2 * in_delta) * t1mt
    outputs = in_ch + numer / denom
    dnum = in_delta ** 2 * (in_dp1 * theta ** 2 + 2 * in_delta * t1mt
                            + in_d * (1 - theta) ** 2)
    return outputs, np.log(dnum) - 2 * np.log(denom)


def _unconstrained_rqs_fwd_np(inputs, uw, uh, ud, tail):
    inside = (inputs >= -tail) & (inputs <= tail)
    outputs = inputs.copy()
    lad = np.zeros_like(inputs)
    if not np.any(inside):
        return outputs, lad
    const = math.log(math.exp(1 - MIN_D) - 1)
    n_in = int(inside.sum())
    und = np.concatenate([np.full((n_in, 1), const), ud[inside],
                          np.full((n_in, 1), const)], axis=-1)
    o, l = _rqs_fwd_np(inputs[inside], uw[inside], uh[inside], und,
                       -tail, tail, -tail, tail)
    outputs[inside] = o
    lad[inside] = l
    return outputs, lad


def nsf_ar_ref(x, init_param, layers):
    x = np.asarray(x, np.float64)
    Bt, Dd = x.shape
    z = np.zeros_like(x)
    log_det = np.zeros(Bt)
    for i in range(Dd):
        if i == 0:
            out = np.broadcast_to(np.asarray(init_param, np.float64),
                                  (Bt, NOUT)).copy()
        else:
            L = {k: np.asarray(v, np.float64) for k, v in layers[i - 1].items()}
            h = np.tanh(x[:, :i] @ L["W1"] + L["b1"])
            h = np.tanh(h @ L["W2"] + L["b2"])
            h = np.tanh(h @ L["W3"] + L["b3"])
            out = h @ L["W4"] + L["b4"]
        Wl = 2 * TAIL * _softmax_np(out[:, :K])
        Hl = 2 * TAIL * _softmax_np(out[:, K:2 * K])
        Dl = _softplus_np(out[:, 2 * K:])
        zi, ld = _unconstrained_rqs_fwd_np(x[:, i], Wl, Hl, Dl, TAIL)
        z[:, i] = zi
        log_det += ld
    return z, log_det


# TODO(synk): NSF_AR.inverse (quadratic-root RQS inverse) is not implemented;
# only the forward pass requested here is ported.

if __name__ == "__main__":
    key = jax.random.PRNGKey(0)
    k_x, k_p = jax.random.split(key)

    x = jax.random.normal(k_x, (BATCH, DIM), dtype=jnp.float32)
    init_param, layers = init_params(k_p)
    W123p, W4p, Bp = pack_params(init_param, layers)

    z, log_det = nsf_ar_forward(x, jnp.asarray(W123p), jnp.asarray(W4p),
                                jnp.asarray(Bp))
    jax.block_until_ready((z, log_det))

    z_ref, ld_ref = nsf_ar_ref(np.asarray(x), init_param, layers)
    assert np.allclose(np.asarray(z), z_ref, rtol=2e-4, atol=2e-4), "z mismatch"
    assert np.allclose(np.asarray(log_det), ld_ref, rtol=2e-4, atol=2e-4), \
        "log_det mismatch"

    print("KERNEL_OK")
</pallas_src>

<mosaic_0001>
module attributes {stable_mosaic.version = 11 : i64} {
  func.func @nsf_ar_fwd_kernel(%arg0: memref<8x8xf32, #tpu.memory_space<vmem>>, %arg1: memref<136x64xf32, #tpu.memory_space<vmem>>, %arg2: memref<64x112xf32, #tpu.memory_space<vmem>>, %arg3: memref<4x112xf32, #tpu.memory_space<vmem>>, %arg4: memref<8x8xf32, #tpu.memory_space<vmem>>, %arg5: memref<8x1xf32, #tpu.memory_space<vmem>>) attributes {dimension_semantics = [], scalar_prefetch = 0 : i64, scratch_operands = 0 : i64, tpu.core_type = #tpu.core_type<tc>} {
    %c0 = arith.constant 0 : index
    %c0_0 = arith.constant 0 : index
    %0 = vector.load %arg0[%c0, %c0_0] : memref<8x8xf32, #tpu.memory_space<vmem>>, vector<8x8xf32>
    %c0_1 = arith.constant 0 : index
    %c0_2 = arith.constant 0 : index
    %1 = vector.load %arg1[%c0_1, %c0_2] : memref<136x64xf32, #tpu.memory_space<vmem>>, vector<8x64xf32>
    %c8 = arith.constant 8 : index
    %c0_3 = arith.constant 0 : index
    %2 = vector.load %arg1[%c8, %c0_3] : memref<136x64xf32, #tpu.memory_space<vmem>>, vector<64x64xf32>
    %c72 = arith.constant 72 : index
    %c0_4 = arith.constant 0 : index
    %3 = vector.load %arg1[%c72, %c0_4] : memref<136x64xf32, #tpu.memory_space<vmem>>, vector<64x64xf32>
    %c0_5 = arith.constant 0 : index
    %c0_6 = arith.constant 0 : index
    %4 = vector.load %arg3[%c0_5, %c0_6] : memref<4x112xf32, #tpu.memory_space<vmem>>, vector<1x64xf32>
    %c1 = arith.constant 1 : index
    %c0_7 = arith.constant 0 : index
    %5 = vector.load %arg3[%c1, %c0_7] : memref<4x112xf32, #tpu.memory_space<vmem>>, vector<1x64xf32>
    %c2 = arith.constant 2 : index
    %c0_8 = arith.constant 0 : index
    %6 = vector.load %arg3[%c2, %c0_8] : memref<4x112xf32, #tpu.memory_space<vmem>>, vector<1x64xf32>
    %c3 = arith.constant 3 : index
    %c0_9 = arith.constant 0 : index
    %7 = vector.load %arg3[%c3, %c0_9] : memref<4x112xf32, #tpu.memory_space<vmem>>, vector<1x112xf32>
    %8 = arith.truncf %0 : vector<8x8xf32> to vector<8x8xbf16>
    %9 = arith.extf %8 : vector<8x8xbf16> to vector<8x8xf32>
    %10 = arith.subf %0, %9 : vector<8x8xf32>
    %11 = arith.truncf %10 : vector<8x8xf32> to vector<8x8xbf16>
    %12 = arith.truncf %1 : vector<8x64xf32> to vector<8x64xbf16>
    %13 = arith.extf %12 : vector<8x64xbf16> to vector<8x64xf32>
    %14 = arith.subf %1, %13 : vector<8x64xf32>
    %15 = arith.truncf %14 : vector<8x64xf32> to vector<8x64xbf16>
    %cst = arith.constant dense<0.000000e+00> : vector<8x64xf32>
    %16 = tpu.matmul %8, %12, %cst {dimension_numbers = #tpu.dot_dimension_numbers<[1], [0], [0], [1], [0, 0, 1, 1], [], []>} : vector<8x8xbf16>, vector<8x64xbf16>, vector<8x64xf32> -> vector<8x64xf32>
    %cst_10 = arith.constant dense<0.000000e+00> : vector<8x64xf32>
    %17 = tpu.matmul %8, %15, %cst_10 {dimension_numbers = #tpu.dot_dimension_numbers<[1], [0], [0], [1], [0, 0, 1, 1], [], []>} : vector<8x8xbf16>, vector<8x64xbf16>, vector<8x64xf32> -> vector<8x64xf32>
    %18 = arith.addf %16, %17 : vector<8x64xf32>
    %cst_11 = arith.constant dense<0.000000e+00> : vector<8x64xf32>
    %19 = tpu.matmul %11, %12, %cst_11 {dimension_numbers = #tpu.dot_dimension_numbers<[1], [0], [0], [1], [0, 0, 1, 1], [], []>} : vector<8x8xbf16>, vector<8x64xbf16>, vector<8x64xf32> -> vector<8x64xf32>
    %20 = arith.addf %18, %19 : vector<8x64xf32>
    %21 = vector.broadcast %4 : vector<1x64xf32> to vector<8x64xf32>
    %22 = arith.addf %20, %21 : vector<8x64xf32>
    %23 = math.tanh %22 : vector<8x64xf32>
    %24 = arith.truncf %23 : vector<8x64xf32> to vector<8x64xbf16>
    %25 = arith.extf %24 : vector<8x64xbf16> to vector<8x64xf32>
    %26 = arith.subf %23, %25 : vector<8x64xf32>
    %27 = arith.truncf %26 : vector<8x64xf32> to vector<8x64xbf16>
    %28 = arith.truncf %2 : vector<64x64xf32> to vector<64x64xbf16>
    %29 = arith.extf %28 : vector<64x64xbf16> to vector<64x64xf32>
    %30 = arith.subf %2, %29 : vector<64x64xf32>
    %31 = arith.truncf %30 : vector<64x64xf32> to vector<64x64xbf16>
    %cst_12 = arith.constant dense<0.000000e+00> : vector<8x64xf32>
    %32 = tpu.matmul %24, %28, %cst_12 {dimension_numbers = #tpu.dot_dimension_numbers<[1], [0], [0], [1], [0, 0, 1, 1], [], []>} : vector<8x64xbf16>, vector<64x64xbf16>, vector<8x64xf32> -> vector<8x64xf32>
    %cst_13 = arith.constant dense<0.000000e+00> : vector<8x64xf32>
    %33 = tpu.matmul %24, %31, %cst_13 {dimension_numbers = #tpu.dot_dimension_numbers<[1], [0], [0], [1], [0, 0, 1, 1], [], []>} : vector<8x64xbf16>, vector<64x64xbf16>, vector<8x64xf32> -> vector<8x64xf32>
    %34 = arith.addf %32, %33 : vector<8x64xf32>
    %cst_14 = arith.constant dense<0.000000e+00> : vector<8x64xf32>
    %35 = tpu.matmul %27, %28, %cst_14 {dimension_numbers = #tpu.dot_dimension_numbers<[1], [0], [0], [1], [0, 0, 1, 1], [], []>} : vector<8x64xbf16>, vector<64x64xbf16>, vector<8x64xf32> -> vector<8x64xf32>
    %36 = arith.addf %34, %35 : vector<8x64xf32>
    %37 = vector.broadcast %5 : vector<1x64xf32> to vector<8x64xf32>
    %38 = arith.addf %36, %37 : vector<8x64xf32>
    %39 = math.tanh %38 : vector<8x64xf32>
    %40 = arith.truncf %39 : vector<8x64xf32> to vector<8x64xbf16>
    %41 = arith.extf %40 : vector<8x64xbf16> to vector<8x64xf32>
    %42 = arith.subf %39, %41 : vector<8x64xf32>
    %43 = arith.truncf %42 : vector<8x64xf32> to vector<8x64xbf16>
    %44 = arith.truncf %3 : vector<64x64xf32> to vector<64x64xbf16>
    %45 = arith.extf %44 : vector<64x64xbf16> to vector<64x64xf32>
    %46 = arith.subf %3, %45 : vector<64x64xf32>
    %47 = arith.truncf %46 : vector<64x64xf32> to vector<64x64xbf16>
    %cst_15 = arith.constant dense<0.000000e+00> : vector<8x64xf32>
    %48 = tpu.matmul %40, %44, %cst_15 {dimension_numbers = #tpu.dot_dimension_numbers<[1], [0], [0], [1], [0, 0, 1, 1], [], []>} : vector<8x64xbf16>, vector<64x64xbf16>, vector<8x64xf32> -> vector<8x64xf32>
    %cst_16 = arith.constant dense<0.000000e+00> : vector<8x64xf32>
    %49 = tpu.matmul %40, %47, %cst_16 {dimension_numbers = #tpu.dot_dimension_numbers<[1], [0], [0], [1], [0, 0, 1, 1], [], []>} : vector<8x64xbf16>, vector<64x64xbf16>, vector<8x64xf32> -> vector<8x64xf32>
    %50 = arith.addf %48, %49 : vector<8x64xf32>
    %cst_17 = arith.constant dense<0.000000e+00> : vector<8x64xf32>
    %51 = tpu.matmul %43, %44, %cst_17 {dimension_numbers = #tpu.dot_dimension_numbers<[1], [0], [0], [1], [0, 0, 1, 1], [], []>} : vector<8x64xbf16>, vector<64x64xbf16>, vector<8x64xf32> -> vector<8x64xf32>
    %52 = arith.addf %50, %51 : vector<8x64xf32>
    %53 = vector.broadcast %6 : vector<1x64xf32> to vector<8x64xf32>
    %54 = arith.addf %52, %53 : vector<8x64xf32>
    %55 = math.tanh %54 : vector<8x64xf32>
    %c0_18 = arith.constant 0 : index
    %c0_19 = arith.constant 0 : index
    %56 = vector.load %arg2[%c0_18, %c0_19] : memref<64x112xf32, #tpu.memory_space<vmem>>, vector<64x112xf32>
    %57 = arith.truncf %55 : vector<8x64xf32> to vector<8x64xbf16>
    %58 = arith.extf %57 : vector<8x64xbf16> to vector<8x64xf32>
    %59 = arith.subf %55, %58 : vector<8x64xf32>
    %60 = arith.truncf %59 : vector<8x64xf32> to vector<8x64xbf16>
    %61 = arith.truncf %56 : vector<64x112xf32> to vector<64x112xbf16>
    %62 = arith.extf %61 : vector<64x112xbf16> to vector<64x112xf32>
    %63 = arith.subf %56, %62 : vector<64x112xf32>
    %64 = arith.truncf %63 : vector<64x112xf32> to vector<64x112xbf16>
    %cst_20 = arith.constant dense<0.000000e+00> : vector<8x112xf32>
    %65 = tpu.matmul %57, %61, %cst_20 {dimension_numbers = #tpu.dot_dimension_numbers<[1], [0], [0], [1], [0, 0, 1, 1], [], []>} : vector<8x64xbf16>, vector<64x112xbf16>, vector<8x112xf32> -> vector<8x112xf32>
    %cst_21 = arith.constant dense<0.000000e+00> : vector<8x112xf32>
    %66 = tpu.matmul %57, %64, %cst_21 {dimension_numbers = #tpu.dot_dimension_numbers<[1], [0], [0], [1], [0, 0, 1, 1], [], []>} : vector<8x64xbf16>, vector<64x112xbf16>, vector<8x112xf32> -> vector<8x112xf32>
    %67 = arith.addf %65, %66 : vector<8x112xf32>
    %cst_22 = arith.constant dense<0.000000e+00> : vector<8x112xf32>
    %68 = tpu.matmul %60, %61, %cst_22 {dimension_numbers = #tpu.dot_dimension_numbers<[1], [0], [0], [1], [0, 0, 1, 1], [], []>} : vector<8x64xbf16>, vector<64x112xbf16>, vector<8x112xf32> -> vector<8x112xf32>
    %69 = arith.addf %67, %68 : vector<8x112xf32>
    %70 = vector.broadcast %7 : vector<1x112xf32> to vector<8x112xf32>
    %71 = arith.addf %69, %70 : vector<8x112xf32>
    %72 = vector.extract_strided_slice %71 {offsets = [0, 0], sizes = [8, 8], strides = [1, 1]} : vector<8x112xf32> to vector<8x8xf32>
    %73 = vector.extract_strided_slice %71 {offsets = [0, 8], sizes = [8, 8], strides = [1, 1]} : vector<8x112xf32> to vector<8x8xf32>
    %74 = vector.extract_strided_slice %71 {offsets = [0, 16], sizes = [8, 8], strides = [1, 1]} : vector<8x112xf32> to vector<8x8xf32>
    %75 = vector.extract_strided_slice %71 {offsets = [0, 24], sizes = [8, 8], strides = [1, 1]} : vector<8x112xf32> to vector<8x8xf32>
    %76 = vector.extract_strided_slice %71 {offsets = [0, 32], sizes = [8, 8], strides = [1, 1]} : vector<8x112xf32> to vector<8x8xf32>
    %77 = vector.extract_strided_slice %71 {offsets = [0, 40], sizes = [8, 8], strides = [1, 1]} : vector<8x112xf32> to vector<8x8xf32>
    %78 = vector.extract_strided_slice %71 {offsets = [0, 48], sizes = [8, 8], strides = [1, 1]} : vector<8x112xf32> to vector<8x8xf32>
    %79 = vector.extract_strided_slice %71 {offsets = [0, 56], sizes = [8, 8], strides = [1, 1]} : vector<8x112xf32> to vector<8x8xf32>
    %80 = vector.extract_strided_slice %71 {offsets = [0, 64], sizes = [8, 8], strides = [1, 1]} : vector<8x112xf32> to vector<8x8xf32>
    %81 = vector.extract_strided_slice %71 {offsets = [0, 72], sizes = [8, 8], strides = [1, 1]} : vector<8x112xf32> to vector<8x8xf32>
    %82 = vector.extract_strided_slice %71 {offsets = [0, 80], sizes = [8, 8], strides = [1, 1]} : vector<8x112xf32> to vector<8x8xf32>
    %83 = vector.extract_strided_slice %71 {offsets = [0, 88], sizes = [8, 8], strides = [1, 1]} : vector<8x112xf32> to vector<8x8xf32>
    %84 = vector.extract_strided_slice %71 {offsets = [0, 96], sizes = [8, 8], strides = [1, 1]} : vector<8x112xf32> to vector<8x8xf32>
    %85 = vector.extract_strided_slice %71 {offsets = [0, 104], sizes = [8, 8], strides = [1, 1]} : vector<8x112xf32> to vector<8x8xf32>
    %86 = arith.maximumf %72, %73 : vector<8x8xf32>
    %87 = arith.maximumf %86, %74 : vector<8x8xf32>
    %88 = arith.maximumf %87, %75 : vector<8x8xf32>
    %89 = arith.maximumf %88, %76 : vector<8x8xf32>
    %90 = arith.subf %72, %89 : vector<8x8xf32>
    %91 = math.exp %90 : vector<8x8xf32>
    %92 = arith.subf %73, %89 : vector<8x8xf32>
    %93 = math.exp %92 : vector<8x8xf32>
    %94 = arith.subf %74, %89 : vector<8x8xf32>
    %95 = math.exp %94 : vector<8x8xf32>
    %96 = arith.subf %75, %89 : vector<8x8xf32>
    %97 = math.exp %96 : vector<8x8xf32>
    %98 = arith.subf %76, %89 : vector<8x8xf32>
    %99 = math.exp %98 : vector<8x8xf32>
    %100 = arith.addf %91, %93 : vector<8x8xf32>
    %101 = arith.addf %100, %95 : vector<8x8xf32>
    %102 = arith.addf %101, %97 : vector<8x8xf32>
    %103 = arith.addf %102, %99 : vector<8x8xf32>
    %104 = tpu.reciprocal %103 {approx = true} : vector<8x8xf32> -> vector<8x8xf32>
    %105 = arith.mulf %103, %104 : vector<8x8xf32>
    %cst_23 = arith.constant 2.000000e+00 : f32
    %106 = vector.broadcast %cst_23 : f32 to vector<8x8xf32>
    %107 = arith.subf %106, %105 : vector<8x8xf32>
    %108 = arith.mulf %104, %107 : vector<8x8xf32>
    %109 = arith.mulf %91, %108 : vector<8x8xf32>
    %110 = arith.mulf %93, %108 : vector<8x8xf32>
    %111 = arith.mulf %95, %108 : vector<8x8xf32>
    %112 = arith.mulf %97, %108 : vector<8x8xf32>
    %113 = arith.mulf %99, %108 : vector<8x8xf32>
    %cst_24 = arith.constant 6.000000e+00 : f32
    %114 = vector.broadcast %cst_24 : f32 to vector<8x8xf32>
    %115 = arith.mulf %114, %109 : vector<8x8xf32>
    %cst_25 = arith.constant 6.000000e+00 : f32
    %116 = vector.broadcast %cst_25 : f32 to vector<8x8xf32>
    %117 = arith.mulf %116, %110 : vector<8x8xf32>
    %cst_26 = arith.constant 6.000000e+00 : f32
    %118 = vector.broadcast %cst_26 : f32 to vector<8x8xf32>
    %119 = arith.mulf %118, %111 : vector<8x8xf32>
    %cst_27 = arith.constant 6.000000e+00 : f32
    %120 = vector.broadcast %cst_27 : f32 to vector<8x8xf32>
    %121 = arith.mulf %120, %112 : vector<8x8xf32>
    %cst_28 = arith.constant 6.000000e+00 : f32
    %122 = vector.broadcast %cst_28 : f32 to vector<8x8xf32>
    %123 = arith.mulf %122, %113 : vector<8x8xf32>
    %124 = arith.maximumf %77, %78 : vector<8x8xf32>
    %125 = arith.maximumf %124, %79 : vector<8x8xf32>
    %126 = arith.maximumf %125, %80 : vector<8x8xf32>
    %127 = arith.maximumf %126, %81 : vector<8x8xf32>
    %128 = arith.subf %77, %127 : vector<8x8xf32>
    %129 = math.exp %128 : vector<8x8xf32>
    %130 = arith.subf %78, %127 : vector<8x8xf32>
    %131 = math.exp %130 : vector<8x8xf32>
    %132 = arith.subf %79, %127 : vector<8x8xf32>
    %133 = math.exp %132 : vector<8x8xf32>
    %134 = arith.subf %80, %127 : vector<8x8xf32>
    %135 = math.exp %134 : vector<8x8xf32>
    %136 = arith.subf %81, %127 : vector<8x8xf32>
    %137 = math.exp %136 : vector<8x8xf32>
    %138 = arith.addf %129, %131 : vector<8x8xf32>
    %139 = arith.addf %138, %133 : vector<8x8xf32>
    %140 = arith.addf %139, %135 : vector<8x8xf32>
    %141 = arith.addf %140, %137 : vector<8x8xf32>
    %142 = tpu.reciprocal %141 {approx = true} : vector<8x8xf32> -> vector<8x8xf32>
    %143 = arith.mulf %141, %142 : vector<8x8xf32>
    %cst_29 = arith.constant 2.000000e+00 : f32
    %144 = vector.broadcast %cst_29 : f32 to vector<8x8xf32>
    %145 = arith.subf %144, %143 : vector<8x8xf32>
    %146 = arith.mulf %142, %145 : vector<8x8xf32>
    %147 = arith.mulf %129, %146 : vector<8x8xf32>
    %148 = arith.mulf %131, %146 : vector<8x8xf32>
    %149 = arith.mulf %133, %146 : vector<8x8xf32>
    %150 = arith.mulf %135, %146 : vector<8x8xf32>
    %151 = arith.mulf %137, %146 : vector<8x8xf32>
    %cst_30 = arith.constant 6.000000e+00 : f32
    %152 = vector.broadcast %cst_30 : f32 to vector<8x8xf32>
    %153 = arith.mulf %152, %147 : vector<8x8xf32>
    %cst_31 = arith.constant 6.000000e+00 : f32
    %154 = vector.broadcast %cst_31 : f32 to vector<8x8xf32>
    %155 = arith.mulf %154, %148 : vector<8x8xf32>
    %cst_32 = arith.constant 6.000000e+00 : f32
    %156 = vector.broadcast %cst_32 : f32 to vector<8x8xf32>
    %157 = arith.mulf %156, %149 : vector<8x8xf32>
    %cst_33 = arith.constant 6.000000e+00 : f32
    %158 = vector.broadcast %cst_33 : f32 to vector<8x8xf32>
    %159 = arith.mulf %158, %150 : vector<8x8xf32>
    %cst_34 = arith.constant 6.000000e+00 : f32
    %160 = vector.broadcast %cst_34 : f32 to vector<8x8xf32>
    %161 = arith.mulf %160, %151 : vector<8x8xf32>
    %cst_35 = arith.constant 0.000000e+00 : f32
    %162 = vector.broadcast %cst_35 : f32 to vector<8x8xf32>
    %163 = arith.maximumf %82, %162 : vector<8x8xf32>
    %164 = math.absf %82 : vector<8x8xf32>
    %cst_36 = arith.constant 0.000000e+00 : f32
    %165 = vector.broadcast %cst_36 : f32 to vector<8x8xf32>
    %166 = arith.subf %165, %164 : vector<8x8xf32>
    %167 = math.exp %166 : vector<8x8xf32>
    %cst_37 = arith.constant 1.000000e+00 : f32
    %168 = vector.broadcast %cst_37 : f32 to vector<8x8xf32>
    %169 = arith.addf %168, %167 : vector<8x8xf32>
    %170 = math.log %169 : vector<8x8xf32>
    %171 = arith.addf %163, %170 : vector<8x8xf32>
    %cst_38 = arith.constant 0.000000e+00 : f32
    %172 = vector.broadcast %cst_38 : f32 to vector<8x8xf32>
    %173 = arith.maximumf %83, %172 : vector<8x8xf32>
    %174 = math.absf %83 : vector<8x8xf32>
    %cst_39 = arith.constant 0.000000e+00 : f32
    %175 = vector.broadcast %cst_39 : f32 to vector<8x8xf32>
    %176 = arith.subf %175, %174 : vector<8x8xf32>
    %177 = math.exp %176 : vector<8x8xf32>
    %cst_40 = arith.constant 1.000000e+00 : f32
    %178 = vector.broadcast %cst_40 : f32 to vector<8x8xf32>
    %179 = arith.addf %178, %177 : vector<8x8xf32>
    %180 = math.log %179 : vector<8x8xf32>
    %181 = arith.addf %173, %180 : vector<8x8xf32>
    %cst_41 = arith.constant 0.000000e+00 : f32
    %182 = vector.broadcast %cst_41 : f32 to vector<8x8xf32>
    %183 = arith.maximumf %84, %182 : vector<8x8xf32>
    %184 = math.absf %84 : vector<8x8xf32>
    %cst_42 = arith.constant 0.000000e+00 : f32
    %185 = vector.broadcast %cst_42 : f32 to vector<8x8xf32>
    %186 = arith.subf %185, %184 : vector<8x8xf32>
    %187 = math.exp %186 : vector<8x8xf32>
    %cst_43 = arith.constant 1.000000e+00 : f32
    %188 = vector.broadcast %cst_43 : f32 to vector<8x8xf32>
    %189 = arith.addf %188, %187 : vector<8x8xf32>
    %190 = math.log %189 : vector<8x8xf32>
    %191 = arith.addf %183, %190 : vector<8x8xf32>
    %cst_44 = arith.constant 0.000000e+00 : f32
    %192 = vector.broadcast %cst_44 : f32 to vector<8x8xf32>
    %193 = arith.maximumf %85, %192 : vector<8x8xf32>
    %194 = math.absf %85 : vector<8x8xf32>
    %cst_45 = arith.constant 0.000000e+00 : f32
    %195 = vector.broadcast %cst_45 : f32 to vector<8x8xf32>
    %196 = arith.subf %195, %194 : vector<8x8xf32>
    %197 = math.exp %196 : vector<8x8xf32>
    %cst_46 = arith.constant 1.000000e+00 : f32
    %198 = vector.broadcast %cst_46 : f32 to vector<8x8xf32>
    %199 = arith.addf %198, %197 : vector<8x8xf32>
    %200 = math.log %199 : vector<8x8xf32>
    %201 = arith.addf %193, %200 : vector<8x8xf32>
    %202 = arith.maximumf %115, %117 : vector<8x8xf32>
    %203 = arith.maximumf %202, %119 : vector<8x8xf32>
    %204 = arith.maximumf %203, %121 : vector<8x8xf32>
    %205 = arith.maximumf %204, %123 : vector<8x8xf32>
    %206 = arith.subf %115, %205 : vector<8x8xf32>
    %207 = math.exp %206 : vector<8x8xf32>
    %208 = arith.subf %117, %205 : vector<8x8xf32>
    %209 = math.exp %208 : vector<8x8xf32>
    %210 = arith.subf %119, %205 : vector<8x8xf32>
    %211 = math.exp %210 : vector<8x8xf32>
    %212 = arith.subf %121, %205 : vector<8x8xf32>
    %213 = math.exp %212 : vector<8x8xf32>
    %214 = arith.subf %123, %205 : vector<8x8xf32>
    %215 = math.exp %214 : vector<8x8xf32>
    %216 = arith.addf %207, %209 : vector<8x8xf32>
    %217 = arith.addf %216, %211 : vector<8x8xf32>
    %218 = arith.addf %217, %213 : vector<8x8xf32>
    %219 = arith.addf %218, %215 : vector<8x8xf32>
    %220 = tpu.reciprocal %219 {approx = true} : vector<8x8xf32> -> vector<8x8xf32>
    %221 = arith.mulf %219, %220 : vector<8x8xf32>
    %cst_47 = arith.constant 2.000000e+00 : f32
    %222 = vector.broadcast %cst_47 : f32 to vector<8x8xf32>
    %223 = arith.subf %222, %221 : vector<8x8xf32>
    %224 = arith.mulf %220, %223 : vector<8x8xf32>
    %225 = arith.mulf %207, %224 : vector<8x8xf32>
    %226 = arith.mulf %209, %224 : vector<8x8xf32>
    %227 = arith.mulf %211, %224 : vector<8x8xf32>
    %228 = arith.mulf %213, %224 : vector<8x8xf32>
    %cst_48 = arith.constant 9.950000e-01 : f32
    %229 = vector.broadcast %cst_48 : f32 to vector<8x8xf32>
    %230 = arith.mulf %229, %225 : vector<8x8xf32>
    %cst_49 = arith.constant 1.000000e-03 : f32
    %231 = vector.broadcast %cst_49 : f32 to vector<8x8xf32>
    %232 = arith.addf %231, %230 : vector<8x8xf32>
    %cst_50 = arith.constant 9.950000e-01 : f32
    %233 = vector.broadcast %cst_50 : f32 to vector<8x8xf32>
    %234 = arith.mulf %233, %226 : vector<8x8xf32>
    %cst_51 = arith.constant 1.000000e-03 : f32
    %235 = vector.broadcast %cst_51 : f32 to vector<8x8xf32>
    %236 = arith.addf %235, %234 : vector<8x8xf32>
    %cst_52 = arith.constant 9.950000e-01 : f32
    %237 = vector.broadcast %cst_52 : f32 to vector<8x8xf32>
    %238 = arith.mulf %237, %227 : vector<8x8xf32>
    %cst_53 = arith.constant 1.000000e-03 : f32
    %239 = vector.broadcast %cst_53 : f32 to vector<8x8xf32>
    %240 = arith.addf %239, %238 : vector<8x8xf32>
    %cst_54 = arith.constant 9.950000e-01 : f32
    %241 = vector.broadcast %cst_54 : f32 to vector<8x8xf32>
    %242 = arith.mulf %241, %228 : vector<8x8xf32>
    %cst_55 = arith.constant 1.000000e-03 : f32
    %243 = vector.broadcast %cst_55 : f32 to vector<8x8xf32>
    %244 = arith.addf %243, %242 : vector<8x8xf32>
    %cst_56 = arith.constant -3.000000e+00 : f32
    %245 = vector.broadcast %cst_56 : f32 to vector<8x8xf32>
    %cst_57 = arith.constant 0.000000e+00 : f32
    %246 = vector.broadcast %cst_57 : f32 to vector<8x8xf32>
    %247 = arith.addf %246, %232 : vector<8x8xf32>
    %cst_58 = arith.constant 6.000000e+00 : f32
    %248 = vector.broadcast %cst_58 : f32 to vector<8x8xf32>
    %249 = arith.mulf %248, %247 : vector<8x8xf32>
    %cst_59 = arith.constant -3.000000e+00 : f32
    %250 = vector.broadcast %cst_59 : f32 to vector<8x8xf32>
    %251 = arith.addf %249, %250 : vector<8x8xf32>
    %252 = arith.addf %247, %236 : vector<8x8xf32>
    %cst_60 = arith.constant 6.000000e+00 : f32
    %253 = vector.broadcast %cst_60 : f32 to vector<8x8xf32>
    %254 = arith.mulf %253, %252 : vector<8x8xf32>
    %cst_61 = arith.constant -3.000000e+00 : f32
    %255 = vector.broadcast %cst_61 : f32 to vector<8x8xf32>
    %256 = arith.addf %254, %255 : vector<8x8xf32>
    %257 = arith.addf %252, %240 : vector<8x8xf32>
    %cst_62 = arith.constant 6.000000e+00 : f32
    %258 = vector.broadcast %cst_62 : f32 to vector<8x8xf32>
    %259 = arith.mulf %258, %257 : vector<8x8xf32>
    %cst_63 = arith.constant -3.000000e+00 : f32
    %260 = vector.broadcast %cst_63 : f32 to vector<8x8xf32>
    %261 = arith.addf %259, %260 : vector<8x8xf32>
    %262 = arith.addf %257, %244 : vector<8x8xf32>
    %cst_64 = arith.constant 6.000000e+00 : f32
    %263 = vector.broadcast %cst_64 : f32 to vector<8x8xf32>
    %264 = arith.mulf %263, %262 : vector<8x8xf32>
    %cst_65 = arith.constant -3.000000e+00 : f32
    %265 = vector.broadcast %cst_65 : f32 to vector<8x8xf32>
    %266 = arith.addf %264, %265 : vector<8x8xf32>
    %cst_66 = arith.constant 3.000000e+00 : f32
    %267 = vector.broadcast %cst_66 : f32 to vector<8x8xf32>
    %268 = arith.subf %251, %245 : vector<8x8xf32>
    %269 = arith.subf %256, %251 : vector<8x8xf32>
    %270 = arith.subf %261, %256 : vector<8x8xf32>
    %271 = arith.subf %266, %261 : vector<8x8xf32>
    %272 = arith.subf %267, %266 : vector<8x8xf32>
    %273 = arith.maximumf %153, %155 : vector<8x8xf32>
    %274 = arith.maximumf %273, %157 : vector<8x8xf32>
    %275 = arith.maximumf %274, %159 : vector<8x8xf32>
    %276 = arith.maximumf %275, %161 : vector<8x8xf32>
    %277 = arith.subf %153, %276 : vector<8x8xf32>
    %278 = math.exp %277 : vector<8x8xf32>
    %279 = arith.subf %155, %276 : vector<8x8xf32>
    %280 = math.exp %279 : vector<8x8xf32>
    %281 = arith.subf %157, %276 : vector<8x8xf32>
    %282 = math.exp %281 : vector<8x8xf32>
    %283 = arith.subf %159, %276 : vector<8x8xf32>
    %284 = math.exp %283 : vector<8x8xf32>
    %285 = arith.subf %161, %276 : vector<8x8xf32>
    %286 = math.exp %285 : vector<8x8xf32>
    %287 = arith.addf %278, %280 : vector<8x8xf32>
    %288 = arith.addf %287, %282 : vector<8x8xf32>
    %289 = arith.addf %288, %284 : vector<8x8xf32>
    %290 = arith.addf %289, %286 : vector<8x8xf32>
    %291 = tpu.reciprocal %290 {approx = true} : vector<8x8xf32> -> vector<8x8xf32>
    %292 = arith.mulf %290, %291 : vector<8x8xf32>
    %cst_67 = arith.constant 2.000000e+00 : f32
    %293 = vector.broadcast %cst_67 : f32 to vector<8x8xf32>
    %294 = arith.subf %293, %292 : vector<8x8xf32>
    %295 = arith.mulf %291, %294 : vector<8x8xf32>
    %296 = arith.mulf %278, %295 : vector<8x8xf32>
    %297 = arith.mulf %280, %295 : vector<8x8xf32>
    %298 = arith.mulf %282, %295 : vector<8x8xf32>
    %299 = arith.mulf %284, %295 : vector<8x8xf32>
    %cst_68 = arith.constant 9.950000e-01 : f32
    %300 = vector.broadcast %cst_68 : f32 to vector<8x8xf32>
    %301 = arith.mulf %300, %296 : vector<8x8xf32>
    %cst_69 = arith.constant 1.000000e-03 : f32
    %302 = vector.broadcast %cst_69 : f32 to vector<8x8xf32>
    %303 = arith.addf %302, %301 : vector<8x8xf32>
    %cst_70 = arith.constant 9.950000e-01 : f32
    %304 = vector.broadcast %cst_70 : f32 to vector<8x8xf32>
    %305 = arith.mulf %304, %297 : vector<8x8xf32>
    %cst_71 = arith.constant 1.000000e-03 : f32
    %306 = vector.broadcast %cst_71 : f32 to vector<8x8xf32>
    %307 = arith.addf %306, %305 : vector<8x8xf32>
    %cst_72 = arith.constant 9.950000e-01 : f32
    %308 = vector.broadcast %cst_72 : f32 to vector<8x8xf32>
    %309 = arith.mulf %308, %298 : vector<8x8xf32>
    %cst_73 = arith.constant 1.000000e-03 : f32
    %310 = vector.broadcast %cst_73 : f32 to vector<8x8xf32>
    %311 = arith.addf %310, %309 : vector<8x8xf32>
    %cst_74 = arith.constant 9.950000e-01 : f32
    %312 = vector.broadcast %cst_74 : f32 to vector<8x8xf32>
    %313 = arith.mulf %312, %299 : vector<8x8xf32>
    %cst_75 = arith.constant 1.000000e-03 : f32
    %314 = vector.broadcast %cst_75 : f32 to vector<8x8xf32>
    %315 = arith.addf %314, %313 : vector<8x8xf32>
    %cst_76 = arith.constant -3.000000e+00 : f32
    %316 = vector.broadcast %cst_76 : f32 to vector<8x8xf32>
    %cst_77 = arith.constant 0.000000e+00 : f32
    %317 = vector.broadcast %cst_77 : f32 to vector<8x8xf32>
    %318 = arith.addf %317, %303 : vector<8x8xf32>
    %cst_78 = arith.constant 6.000000e+00 : f32
    %319 = vector.broadcast %cst_78 : f32 to vector<8x8xf32>
    %320 = arith.mulf %319, %318 : vector<8x8xf32>
    %cst_79 = arith.constant -3.000000e+00 : f32
    %321 = vector.broadcast %cst_79 : f32 to vector<8x8xf32>
    %322 = arith.addf %320, %321 : vector<8x8xf32>
    %323 = arith.addf %318, %307 : vector<8x8xf32>
    %cst_80 = arith.constant 6.000000e+00 : f32
    %324 = vector.broadcast %cst_80 : f32 to vector<8x8xf32>
    %325 = arith.mulf %324, %323 : vector<8x8xf32>
    %cst_81 = arith.constant -3.000000e+00 : f32
    %326 = vector.broadcast %cst_81 : f32 to vector<8x8xf32>
    %327 = arith.addf %325, %326 : vector<8x8xf32>
    %328 = arith.addf %323, %311 : vector<8x8xf32>
    %cst_82 = arith.constant 6.000000e+00 : f32
    %329 = vector.broadcast %cst_82 : f32 to vector<8x8xf32>
    %330 = arith.mulf %329, %328 : vector<8x8xf32>
    %cst_83 = arith.constant -3.000000e+00 : f32
    %331 = vector.broadcast %cst_83 : f32 to vector<8x8xf32>
    %332 = arith.addf %330, %331 : vector<8x8xf32>
    %333 = arith.addf %328, %315 : vector<8x8xf32>
    %cst_84 = arith.constant 6.000000e+00 : f32
    %334 = vector.broadcast %cst_84 : f32 to vector<8x8xf32>
    %335 = arith.mulf %334, %333 : vector<8x8xf32>
    %cst_85 = arith.constant -3.000000e+00 : f32
    %336 = vector.broadcast %cst_85 : f32 to vector<8x8xf32>
    %337 = arith.addf %335, %336 : vector<8x8xf32>
    %cst_86 = arith.constant 3.000000e+00 : f32
    %338 = vector.broadcast %cst_86 : f32 to vector<8x8xf32>
    %339 = arith.subf %322, %316 : vector<8x8xf32>
    %340 = arith.subf %327, %322 : vector<8x8xf32>
    %341 = arith.subf %332, %327 : vector<8x8xf32>
    %342 = arith.subf %337, %332 : vector<8x8xf32>
    %343 = arith.subf %338, %337 : vector<8x8xf32>
    %cst_87 = arith.constant 1.000000e+00 : f32
    %344 = vector.broadcast %cst_87 : f32 to vector<8x8xf32>
    %cst_88 = arith.constant 0.000000e+00 : f32
    %345 = vector.broadcast %cst_88 : f32 to vector<8x8xf32>
    %346 = arith.maximumf %171, %345 : vector<8x8xf32>
    %347 = math.absf %171 : vector<8x8xf32>
    %cst_89 = arith.constant 0.000000e+00 : f32
    %348 = vector.broadcast %cst_89 : f32 to vector<8x8xf32>
    %349 = arith.subf %348, %347 : vector<8x8xf32>
    %350 = math.exp %349 : vector<8x8xf32>
    %cst_90 = arith.constant 1.000000e+00 : f32
    %351 = vector.broadcast %cst_90 : f32 to vector<8x8xf32>
    %352 = arith.addf %351, %350 : vector<8x8xf32>
    %353 = math.log %352 : vector<8x8xf32>
    %354 = arith.addf %346, %353 : vector<8x8xf32>
    %cst_91 = arith.constant 1.000000e-03 : f32
    %355 = vector.broadcast %cst_91 : f32 to vector<8x8xf32>
    %356 = arith.addf %355, %354 : vector<8x8xf32>
    %cst_92 = arith.constant 0.000000e+00 : f32
    %357 = vector.broadcast %cst_92 : f32 to vector<8x8xf32>
    %358 = arith.maximumf %181, %357 : vector<8x8xf32>
    %359 = math.absf %181 : vector<8x8xf32>
    %cst_93 = arith.constant 0.000000e+00 : f32
    %360 = vector.broadcast %cst_93 : f32 to vector<8x8xf32>
    %361 = arith.subf %360, %359 : vector<8x8xf32>
    %362 = math.exp %361 : vector<8x8xf32>
    %cst_94 = arith.constant 1.000000e+00 : f32
    %363 = vector.broadcast %cst_94 : f32 to vector<8x8xf32>
    %364 = arith.addf %363, %362 : vector<8x8xf32>
    %365 = math.log %364 : vector<8x8xf32>
    %366 = arith.addf %358, %365 : vector<8x8xf32>
    %cst_95 = arith.constant 1.000000e-03 : f32
    %367 = vector.broadcast %cst_95 : f32 to vector<8x8xf32>
    %368 = arith.addf %367, %366 : vector<8x8xf32>
    %cst_96 = arith.constant 0.000000e+00 : f32
    %369 = vector.broadcast %cst_96 : f32 to vector<8x8xf32>
    %370 = arith.maximumf %191, %369 : vector<8x8xf32>
    %371 = math.absf %191 : vector<8x8xf32>
    %cst_97 = arith.constant 0.000000e+00 : f32
    %372 = vector.broadcast %cst_97 : f32 to vector<8x8xf32>
    %373 = arith.subf %372, %371 : vector<8x8xf32>
    %374 = math.exp %373 : vector<8x8xf32>
    %cst_98 = arith.constant 1.000000e+00 : f32
    %375 = vector.broadcast %cst_98 : f32 to vector<8x8xf32>
    %376 = arith.addf %375, %374 : vector<8x8xf32>
    %377 = math.log %376 : vector<8x8xf32>
    %378 = arith.addf %370, %377 : vector<8x8xf32>
    %cst_99 = arith.constant 1.000000e-03 : f32
    %379 = vector.broadcast %cst_99 : f32 to vector<8x8xf32>
    %380 = arith.addf %379, %378 : vector<8x8xf32>
    %cst_100 = arith.constant 0.000000e+00 : f32
    %381 = vector.broadcast %cst_100 : f32 to vector<8x8xf32>
    %382 = arith.maximumf %201, %381 : vector<8x8xf32>
    %383 = math.absf %201 : vector<8x8xf32>
    %cst_101 = arith.constant 0.000000e+00 : f32
    %384 = vector.broadcast %cst_101 : f32 to vector<8x8xf32>
    %385 = arith.subf %384, %383 : vector<8x8xf32>
    %386 = math.exp %385 : vector<8x8xf32>
    %cst_102 = arith.constant 1.000000e+00 : f32
    %387 = vector.broadcast %cst_102 : f32 to vector<8x8xf32>
    %388 = arith.addf %387, %386 : vector<8x8xf32>
    %389 = math.log %388 : vector<8x8xf32>
    %390 = arith.addf %382, %389 : vector<8x8xf32>
    %cst_103 = arith.constant 1.000000e-03 : f32
    %391 = vector.broadcast %cst_103 : f32 to vector<8x8xf32>
    %392 = arith.addf %391, %390 : vector<8x8xf32>
    %cst_104 = arith.constant -3.000000e+00 : f32
    %cst_105 = arith.constant 3.000000e+00 : f32
    %393 = vector.broadcast %cst_104 : f32 to vector<8x8xf32>
    %394 = arith.maximumf %393, %0 : vector<8x8xf32>
    %395 = vector.broadcast %cst_105 : f32 to vector<8x8xf32>
    %396 = arith.minimumf %395, %394 : vector<8x8xf32>
    %cst_106 = arith.constant 0.000000e+00 : f32
    %397 = vector.broadcast %cst_106 : f32 to vector<8x8xf32>
    %398 = arith.cmpf oge, %396, %245 : vector<8x8xf32>
    %399 = arith.cmpf olt, %396, %251 : vector<8x8xf32>
    %400 = arith.andi %398, %399 : vector<8x8xi1>
    %401 = arith.extui %400 : vector<8x8xi1> to vector<8x8xi32>
    %402 = arith.sitofp %401 : vector<8x8xi32> to vector<8x8xf32>
    %403 = arith.mulf %402, %245 : vector<8x8xf32>
    %404 = arith.addf %397, %403 : vector<8x8xf32>
    %405 = arith.mulf %402, %268 : vector<8x8xf32>
    %406 = arith.addf %397, %405 : vector<8x8xf32>
    %407 = arith.mulf %402, %316 : vector<8x8xf32>
    %408 = arith.addf %397, %407 : vector<8x8xf32>
    %409 = arith.mulf %402, %339 : vector<8x8xf32>
    %410 = arith.addf %397, %409 : vector<8x8xf32>
    %411 = arith.mulf %402, %344 : vector<8x8xf32>
    %412 = arith.addf %397, %411 : vector<8x8xf32>
    %413 = arith.mulf %402, %356 : vector<8x8xf32>
    %414 = arith.addf %397, %413 : vector<8x8xf32>
    %415 = arith.cmpf oge, %396, %251 : vector<8x8xf32>
    %416 = arith.cmpf olt, %396, %256 : vector<8x8xf32>
    %417 = arith.andi %415, %416 : vector<8x8xi1>
    %418 = arith.extui %417 : vector<8x8xi1> to vector<8x8xi32>
    %419 = arith.sitofp %418 : vector<8x8xi32> to vector<8x8xf32>
    %420 = arith.mulf %419, %251 : vector<8x8xf32>
    %421 = arith.addf %404, %420 : vector<8x8xf32>
    %422 = arith.mulf %419, %269 : vector<8x8xf32>
    %423 = arith.addf %406, %422 : vector<8x8xf32>
    %424 = arith.mulf %419, %322 : vector<8x8xf32>
    %425 = arith.addf %408, %424 : vector<8x8xf32>
    %426 = arith.mulf %419, %340 : vector<8x8xf32>
    %427 = arith.addf %410, %426 : vector<8x8xf32>
    %428 = arith.mulf %419, %356 : vector<8x8xf32>
    %429 = arith.addf %412, %428 : vector<8x8xf32>
    %430 = arith.mulf %419, %368 : vector<8x8xf32>
    %431 = arith.addf %414, %430 : vector<8x8xf32>
    %432 = arith.cmpf oge, %396, %256 : vector<8x8xf32>
    %433 = arith.cmpf olt, %396, %261 : vector<8x8xf32>
    %434 = arith.andi %432, %433 : vector<8x8xi1>
    %435 = arith.extui %434 : vector<8x8xi1> to vector<8x8xi32>
    %436 = arith.sitofp %435 : vector<8x8xi32> to vector<8x8xf32>
    %437 = arith.mulf %436, %256 : vector<8x8xf32>
    %438 = arith.addf %421, %437 : vector<8x8xf32>
    %439 = arith.mulf %436, %270 : vector<8x8xf32>
    %440 = arith.addf %423, %439 : vector<8x8xf32>
    %441 = arith.mulf %436, %327 : vector<8x8xf32>
    %442 = arith.addf %425, %441 : vector<8x8xf32>
    %443 = arith.mulf %436, %341 : vector<8x8xf32>
    %444 = arith.addf %427, %443 : vector<8x8xf32>
    %445 = arith.mulf %436, %368 : vector<8x8xf32>
    %446 = arith.addf %429, %445 : vector<8x8xf32>
    %447 = arith.mulf %436, %380 : vector<8x8xf32>
    %448 = arith.addf %431, %447 : vector<8x8xf32>
    %449 = arith.cmpf oge, %396, %261 : vector<8x8xf32>
    %450 = arith.cmpf olt, %396, %266 : vector<8x8xf32>
    %451 = arith.andi %449, %450 : vector<8x8xi1>
    %452 = arith.extui %451 : vector<8x8xi1> to vector<8x8xi32>
    %453 = arith.sitofp %452 : vector<8x8xi32> to vector<8x8xf32>
    %454 = arith.mulf %453, %261 : vector<8x8xf32>
    %455 = arith.addf %438, %454 : vector<8x8xf32>
    %456 = arith.mulf %453, %271 : vector<8x8xf32>
    %457 = arith.addf %440, %456 : vector<8x8xf32>
    %458 = arith.mulf %453, %332 : vector<8x8xf32>
    %459 = arith.addf %442, %458 : vector<8x8xf32>
    %460 = arith.mulf %453, %342 : vector<8x8xf32>
    %461 = arith.addf %444, %460 : vector<8x8xf32>
    %462 = arith.mulf %453, %380 : vector<8x8xf32>
    %463 = arith.addf %446, %462 : vector<8x8xf32>
    %464 = arith.mulf %453, %392 : vector<8x8xf32>
    %465 = arith.addf %448, %464 : vector<8x8xf32>
    %cst_107 = arith.constant 9.99999997E-7 : f32
    %466 = vector.broadcast %cst_107 : f32 to vector<8x8xf32>
    %467 = arith.addf %267, %466 : vector<8x8xf32>
    %468 = arith.cmpf oge, %396, %266 : vector<8x8xf32>
    %469 = arith.cmpf olt, %396, %467 : vector<8x8xf32>
    %470 = arith.andi %468, %469 : vector<8x8xi1>
    %471 = arith.extui %470 : vector<8x8xi1> to vector<8x8xi32>
    %472 = arith.sitofp %471 : vector<8x8xi32> to vector<8x8xf32>
    %473 = arith.mulf %472, %266 : vector<8x8xf32>
    %474 = arith.addf %455, %473 : vector<8x8xf32>
    %475 = arith.mulf %472, %272 : vector<8x8xf32>
    %476 = arith.addf %457, %475 : vector<8x8xf32>
    %477 = arith.mulf %472, %337 : vector<8x8xf32>
    %478 = arith.addf %459, %477 : vector<8x8xf32>
    %479 = arith.mulf %472, %343 : vector<8x8xf32>
    %480 = arith.addf %461, %479 : vector<8x8xf32>
    %481 = arith.mulf %472, %392 : vector<8x8xf32>
    %482 = arith.addf %463, %481 : vector<8x8xf32>
    %483 = arith.mulf %472, %344 : vector<8x8xf32>
    %484 = arith.addf %465, %483 : vector<8x8xf32>
    %485 = tpu.reciprocal %476 {approx = true} : vector<8x8xf32> -> vector<8x8xf32>
    %486 = arith.mulf %476, %485 : vector<8x8xf32>
    %cst_108 = arith.constant 2.000000e+00 : f32
    %487 = vector.broadcast %cst_108 : f32 to vector<8x8xf32>
    %488 = arith.subf %487, %486 : vector<8x8xf32>
    %489 = arith.mulf %485, %488 : vector<8x8xf32>
    %490 = arith.mulf %480, %489 : vector<8x8xf32>
    %491 = arith.subf %396, %474 : vector<8x8xf32>
    %492 = arith.mulf %491, %489 : vector<8x8xf32>
    %cst_109 = arith.constant 1.000000e+00 : f32
    %493 = vector.broadcast %cst_109 : f32 to vector<8x8xf32>
    %494 = arith.subf %493, %492 : vector<8x8xf32>
    %495 = arith.mulf %492, %494 : vector<8x8xf32>
    %496 = arith.mulf %492, %492 : vector<8x8xf32>
    %497 = arith.mulf %490, %496 : vector<8x8xf32>
    %498 = arith.mulf %482, %495 : vector<8x8xf32>
    %499 = arith.addf %497, %498 : vector<8x8xf32>
    %500 = arith.mulf %480, %499 : vector<8x8xf32>
    %501 = arith.addf %482, %484 : vector<8x8xf32>
    %cst_110 = arith.constant 2.000000e+00 : f32
    %502 = vector.broadcast %cst_110 : f32 to vector<8x8xf32>
    %503 = arith.mulf %502, %490 : vector<8x8xf32>
    %504 = arith.subf %501, %503 : vector<8x8xf32>
    %505 = arith.mulf %504, %495 : vector<8x8xf32>
    %506 = arith.addf %490, %505 : vector<8x8xf32>
    %507 = tpu.reciprocal %506 {approx = true} : vector<8x8xf32> -> vector<8x8xf32>
    %508 = arith.mulf %506, %507 : vector<8x8xf32>
    %cst_111 = arith.constant 2.000000e+00 : f32
    %509 = vector.broadcast %cst_111 : f32 to vector<8x8xf32>
    %510 = arith.subf %509, %508 : vector<8x8xf32>
    %511 = arith.mulf %507, %510 : vector<8x8xf32>
    %512 = arith.mulf %500, %511 : vector<8x8xf32>
    %513 = arith.addf %478, %512 : vector<8x8xf32>
    %514 = arith.mulf %490, %490 : vector<8x8xf32>
    %515 = arith.mulf %484, %496 : vector<8x8xf32>
    %cst_112 = arith.constant 2.000000e+00 : f32
    %516 = vector.broadcast %cst_112 : f32 to vector<8x8xf32>
    %517 = arith.mulf %516, %490 : vector<8x8xf32>
    %518 = arith.mulf %517, %495 : vector<8x8xf32>
    %519 = arith.addf %515, %518 : vector<8x8xf32>
    %520 = arith.mulf %482, %494 : vector<8x8xf32>
    %521 = arith.mulf %520, %494 : vector<8x8xf32>
    %522 = arith.addf %519, %521 : vector<8x8xf32>
    %523 = arith.mulf %514, %522 : vector<8x8xf32>
    %524 = arith.mulf %511, %511 : vector<8x8xf32>
    %525 = arith.mulf %523, %524 : vector<8x8xf32>
    %526 = math.log %525 : vector<8x8xf32>
    %cst_113 = arith.constant -3.000000e+00 : f32
    %527 = vector.broadcast %cst_113 : f32 to vector<8x8xf32>
    %528 = arith.cmpf oge, %0, %527 : vector<8x8xf32>
    %cst_114 = arith.constant 3.000000e+00 : f32
    %529 = vector.broadcast %cst_114 : f32 to vector<8x8xf32>
    %530 = arith.cmpf ole, %0, %529 : vector<8x8xf32>
    %531 = arith.andi %528, %530 : vector<8x8xi1>
    %532 = arith.select %531, %513, %0 : vector<8x8xi1>, vector<8x8xf32>
    %cst_115 = arith.constant 0.000000e+00 : f32
    %533 = vector.broadcast %cst_115 : f32 to vector<8x8xf32>
    %534 = arith.select %531, %526, %533 : vector<8x8xi1>, vector<8x8xf32>
    %c0_116 = arith.constant 0 : index
    %c0_117 = arith.constant 0 : index
    %535 = vector.load %arg4[%c0_116, %c0_117] : memref<8x8xf32, #tpu.memory_space<vmem>>, vector<8x8xf32>
    tpu.vector_store %arg4[%c0_116, %c0_117], %532 {strides = array<i32>} : memref<8x8xf32, #tpu.memory_space<vmem>>, vector<8x8xf32>,
    %cst_118 = arith.constant dense<0.000000e+00> : vector<8xf32>
    %536 = vector.multi_reduction <add>, %534, %cst_118 [1] : vector<8x8xf32> to vector<8xf32>
    %537 = vector.shape_cast %536 : vector<8xf32> to vector<8x1xf32>
    %c0_119 = arith.constant 0 : index
    %c0_120 = arith.constant 0 : index
    %538 = vector.load %arg5[%c0_119, %c0_120] : memref<8x1xf32, #tpu.memory_space<vmem>>, vector<8x1xf32>
    tpu.vector_store %arg5[%c0_119, %c0_120], %537 {strides = array<i32>} : memref<8x1xf32, #tpu.memory_space<vmem>>, vector<8x1xf32>,
    return
  }
}

</mosaic_0001>

<llo_original>
// kernel: tpu_custom_call.1
$region0: #{tpu_custom_call.1}
  #allocation0 [shape = 'u32[]', space=smem, size = 0x4, offset = 0x4, fixed_abs, tag = 'smem constant byte address 0x4 - core index']
  #allocation1 [shape = 'u32[144,128]{1,0:T(1,128)}', space=vmem, size = 0x12000, scoped, tag = 'internal scratch']
  %s0 = inlined_call_operand.vmem [shape: f32[8,8], index: 0, kind: input, shape index: {}]
  %s1 = inlined_call_operand.vmem [shape: f32[136,64], index: 1, kind: input, shape index: {}]
  %s2 = inlined_call_operand.vmem [shape: f32[64,112], index: 2, kind: input, shape index: {}]
  %s3 = inlined_call_operand.vmem [shape: f32[4,112], index: 3, kind: input, shape index: {}]
  %s4 = inlined_call_operand.hbm [shape: f32[8,8], index: 4, kind: output, shape index: {0}]
  %s5 = inlined_call_operand.vmem [shape: f32[8,1], index: 5, kind: output, shape index: {1}]
  %6 = xla_tuple %s4, %s5
  %s7 = sld [smem:[#allocation0]]
  $region34: #{tpu_custom_call.1} parent=0
    _
  %s9 = ssub.s32 1, %s7
  %s10 = scalar_select 0, %s9, %s7
  $region1: #{tpu_custom_call.1} parent=0
    #allocation2 [shape = 'u8[4096]{0}', space=vmem, size = 0x1000, scoped, tag = 'output window, operand 0, single buffered']
    #allocation3 [shape = 's32[1]{0}', space=sflag, size = 0x4, scoped, tag = 'scoped memory for tpu_custom_call.1']
    %11 = vsyncpa [#allocation3], 0
    // Predicated region
    $region2: #{tpu_custom_call.1} parent=1 // pred_check
      _
    $region3: #{tpu_custom_call.1} parent=1 // pred_check_branch
      %13 = sbr.rel (0) target = $region5
    $region4: #{tpu_custom_call.1} parent=1 // pred_region
      _
    $region5: #{tpu_custom_call.1} parent=1 // pred_fallthru
      _
    // Predicated region
    $region6: #{tpu_custom_call.1} parent=1 // pred_check
      _
    $region7: #{tpu_custom_call.1} parent=1 // pred_check_branch
      %15 = sbr.rel (0) target = $region9
    $region8: #{tpu_custom_call.1} parent=1 // pred_region
      _
    $region9: #{tpu_custom_call.1} parent=1 // pred_fallthru
      _
    // Predicated region
    $region10: #{tpu_custom_call.1} parent=1 // pred_check
      _
    $region11: #{tpu_custom_call.1} parent=1 // pred_check_branch
      %17 = sbr.rel (0) target = $region13
    $region12: #{tpu_custom_call.1} parent=1 // pred_region
      _
    $region13: #{tpu_custom_call.1} parent=1 // pred_fallthru
      _
    // Predicated region
    $region14: #{tpu_custom_call.1} parent=1 // pred_check
      _
    $region15: #{tpu_custom_call.1} parent=1 // pred_check_branch
      %19 = sbr.rel (0) target = $region17
    $region16: #{tpu_custom_call.1} parent=1 // pred_region
      _
    $region17: #{tpu_custom_call.1} parent=1 // pred_fallthru
      _
    %v21 = vld [vmem:[%s0] sm:$0xff]
    %v22 = vld [vmem:[%s1] sm:$0xff]
    %v23 = vld [vmem:[%s1 + $0x8] sm:$0xff]
    %v24 = vld [vmem:[%s1 + $0x10] sm:$0xff]
    %v25 = vld [vmem:[%s1 + $0x18] sm:$0xff]
    %v26 = vld [vmem:[%s1 + $0x20] sm:$0xff]
    %v27 = vld [vmem:[%s1 + $0x28] sm:$0xff]
    %v28 = vld [vmem:[%s1 + $0x30] sm:$0xff]
    %v29 = vld [vmem:[%s1 + $0x38] sm:$0xff]
    %v30 = vld [vmem:[%s1 + $0x40] sm:$0xff]
    %v31 = vld [vmem:[%s1 + $0x48] sm:$0xff]
    %v32 = vld [vmem:[%s1 + $0x50] sm:$0xff]
    %v33 = vld [vmem:[%s1 + $0x58] sm:$0xff]
    %v34 = vld [vmem:[%s1 + $0x60] sm:$0xff]
    %v35 = vld [vmem:[%s1 + $0x68] sm:$0xff]
    %v36 = vld [vmem:[%s1 + $0x70] sm:$0xff]
    %v37 = vld [vmem:[%s1 + $0x78] sm:$0xff]
    %v38 = vld [vmem:[%s1 + $0x80] sm:$0xff]
    %v39 = vld [vmem:[%s3] sm:$0x1]
    %v40 = vld [vmem:[%s3 + $0x1] sm:$0x1]
    %v41 = vld [vmem:[%s3 + $0x2] sm:$0x1]
    %v42 = vld [vmem:[%s3 + $0x3] sm:$0x1]
    %v43 = vpack.c.bf16 %v21, %v21
    %v44 = vunpack.c.l.bf16 %v43
    %v45 = vsub.f32 %v21, %v44
    %v46 = vpack.c.bf16 %v45, %v45
    %v47 = vpack.c.bf16 %v22, %v22
    %v48 = vunpack.c.l.bf16 %v47
    %v49 = vsub.f32 %v22, %v48
    %v50 = vpack.c.bf16 %v49, %v49
    %vm51 = vcmask 64512
    %v53 = vsel %vm51, %v43, 0
    %vm55 = vcmask 1043456
    %v57 = vsel %vm55, %v50, 0
    %59 = vmatprep.subr.bf16.mxu0 0
    %60 = vmatpush1.bf16.msra.mxu0 0
    %61 = vmatprep.subr.bf16.mxu0 0
    %62 = vmatpush1.bf16.msra.mxu0 0
    %63 = vmatprep.subr.bf16.mxu0 0
    %64 = vmatpush1.bf16.msra.mxu0 0
    %65 = vmatprep.subr.bf16.mxu0 0
    %66 = vmatpush1.bf16.msra.mxu0 0
    %67 = vmatprep.subr.bf16.mxu0 0
    %68 = vmatpush1.bf16.msra.mxu0 0
    %69 = vmatprep.subr.bf16.mxu0 0
    %70 = vmatpush1.bf16.msra.mxu0 0
    %71 = vmatprep.subr.bf16.mxu0 0
    %72 = vmatpush1.bf16.msra.mxu0 0
    %73 = vmatprep.subr.bf16.mxu0 0
    %74 = vmatpush1.bf16.msra.mxu0 %v57
    %75 = vmatprep.subr.bf16.mxu0 0
    %76 = vmatpush2.bf16.msra.mxu0 0
    %77 = vmatprep.subr.bf16.mxu0 0
    %78 = vmatpush2.bf16.msra.mxu0 0
    %79 = vmatprep.subr.bf16.mxu0 0
    %80 = vmatpush2.bf16.msra.mxu0 0
    %81 = vmatprep.subr.bf16.mxu0 0
    %82 = vmatpush2.bf16.msra.mxu0 0
    %83 = vmatprep.subr.bf16.mxu0 0
    %84 = vmatpush2.bf16.msra.mxu0 0
    %85 = vmatprep.subr.bf16.mxu0 0
    %86 = vmatpush2.bf16.msra.mxu0 0
    %87 = vmatprep.subr.bf16.mxu0 0
    %88 = vmatpush2.bf16.msra.mxu0 0
    %89 = vmatprep.subr.bf16.mxu0 0
    %90 = vmatpush2.bf16.msra.mxu0 0
    %91 = vmatprep.mubr.bf16.mxu0 0
    %92 = vmatmul.mubr.bf16.gmra.mxu0 %v53
    %v93 = vpop.f32.mrf.mxu0
    %v94 = vadd.f32 0.0, %v93
    %v95 = vpop.f32.mrf.mxu0
    %v96 = vpop.f32.mrf.mxu0
    %v97 = vpop.f32.mrf.mxu0
    %98 = vdwg.mxu0
    %v100 = vsel %vm55, %v47, 0
    %102 = vmatprep.subr.bf16.mxu0 0
    %103 = vmatpush1.bf16.msra.mxu0 0
    %104 = vmatprep.subr.bf16.mxu0 0
    %105 = vmatpush1.bf16.msra.mxu0 0
    %106 = vmatprep.subr.bf16.mxu0 0
    %107 = vmatpush1.bf16.msra.mxu0 0
    %108 = vmatprep.subr.bf16.mxu0 0
    %109 = vmatpush1.bf16.msra.mxu0 0
    %110 = vmatprep.subr.bf16.mxu0 0
    %111 = vmatpush1.bf16.msra.mxu0 0
    %112 = vmatprep.subr.bf16.mxu0 0
    %113 = vmatpush1.bf16.msra.mxu0 0
    %114 = vmatprep.subr.bf16.mxu0 0
    %115 = vmatpush1.bf16.msra.mxu0 0
    %116 = vmatprep.subr.bf16.mxu0 0
    %117 = vmatpush1.bf16.msra.mxu0 %v100
    %118 = vmatprep.subr.bf16.mxu0 0
    %119 = vmatpush2.bf16.msra.mxu0 0
    %120 = vmatprep.subr.bf16.mxu0 0
    %121 = vmatpush2.bf16.msra.mxu0 0
    %122 = vmatprep.subr.bf16.mxu0 0
    %123 = vmatpush2.bf16.msra.mxu0 0
    %124 = vmatprep.subr.bf16.mxu0 0
    %125 = vmatpush2.bf16.msra.mxu0 0
    %126 = vmatprep.subr.bf16.mxu0 0
    %127 = vmatpush2.bf16.msra.mxu0 0
    %128 = vmatprep.subr.bf16.mxu0 0
    %129 = vmatpush2.bf16.msra.mxu0 0
    %130 = vmatprep.subr.bf16.mxu0 0
    %131 = vmatpush2.bf16.msra.mxu0 0
    %132 = vmatprep.subr.bf16.mxu0 0
    %133 = vmatpush2.bf16.msra.mxu0 0
    %134 = vmatprep.mubr.bf16.mxu0 0
    %135 = vmatmul.mubr.bf16.gmra.mxu0 %v53
    %v136 = vpop.f32.mrf.mxu0
    %v137 = vadd.f32 %v94, %v136
    %v138 = vpop.f32.mrf.mxu0
    %v139 = vpop.f32.mrf.mxu0
    %v140 = vpop.f32.mrf.mxu0
    %141 = vdwg.mxu0
    %v143 = vsel %vm51, %v46, 0
    %145 = vmatprep.subr.bf16.mxu0 0
    %146 = vmatpush1.bf16.msra.mxu0 0
    %147 = vmatprep.subr.bf16.mxu0 0
    %148 = vmatpush1.bf16.msra.mxu0 0
    %149 = vmatprep.subr.bf16.mxu0 0
    %150 = vmatpush1.bf16.msra.mxu0 0
    %151 = vmatprep.subr.bf16.mxu0 0
    %152 = vmatpush1.bf16.msra.mxu0 0
    %153 = vmatprep.subr.bf16.mxu0 0
    %154 = vmatpush1.bf16.msra.mxu0 0
    %155 = vmatprep.subr.bf16.mxu0 0
    %156 = vmatpush1.bf16.msra.mxu0 0
    %157 = vmatprep.subr.bf16.mxu0 0
    %158 = vmatpush1.bf16.msra.mxu0 0
    %159 = vmatprep.subr.bf16.mxu0 0
    %160 = vmatpush1.bf16.msra.mxu0 %v100
    %161 = vmatprep.subr.bf16.mxu0 0
    %162 = vmatpush2.bf16.msra.mxu0 0
    %163 = vmatprep.subr.bf16.mxu0 0
    %164 = vmatpush2.bf16.msra.mxu0 0
    %165 = vmatprep.subr.bf16.mxu0 0
    %166 = vmatpush2.bf16.msra.mxu0 0
    %167 = vmatprep.subr.bf16.mxu0 0
    %168 = vmatpush2.bf16.msra.mxu0 0
    %169 = vmatprep.subr.bf16.mxu0 0
    %170 = vmatpush2.bf16.msra.mxu0 0
    %171 = vmatprep.subr.bf16.mxu0 0
    %172 = vmatpush2.bf16.msra.mxu0 0
    %173 = vmatprep.subr.bf16.mxu0 0
    %174 = vmatpush2.bf16.msra.mxu0 0
    %175 = vmatprep.subr.bf16.mxu0 0
    %176 = vmatpush2.bf16.msra.mxu0 0
    %177 = vmatprep.mubr.bf16.mxu0 0
    %178 = vmatmul.mubr.bf16.gmra.mxu0 %v143
    %v179 = vpop.f32.mrf.mxu0
    %v180 = vadd.f32 0.0, %v179
    %v181 = vpop.f32.mrf.mxu0
    %v182 = vpop.f32.mrf.mxu0
    %v183 = vpop.f32.mrf.mxu0
    %184 = vdwg.mxu0
    %v185 = vadd.f32 %v137, %v180
    %v186 = vlaneseq
    %v187 = vshrl.u32 %v186, 7
    %v188 = vsub.s32 0, %v187
    %v189 = vrot.slane %v39, %v188
    %v190 = vadd.f32 %v185, %v189
    %v191 = vtanh.pop %v190
    %v192 = vpack.c.bf16 %v191, %v191
    %v193 = vunpack.c.l.bf16 %v192
    %v194 = vsub.f32 %v191, %v193
    %v195 = vpack.c.bf16 %v194, %v194
    %v196 = vpack.c.bf16 %v24, %v23
    %v197 = vpack.c.bf16 %v26, %v25
    %v198 = vpack.c.bf16 %v28, %v27
    %v199 = vpack.c.bf16 %v30, %v29
    %v200 = vunpack.c.l.bf16 %v196
    %v201 = vunpack.c.h.bf16 %v196
    %v202 = vunpack.c.l.bf16 %v197
    %v203 = vunpack.c.h.bf16 %v197
    %v204 = vunpack.c.l.bf16 %v198
    %v205 = vunpack.c.h.bf16 %v198
    %v206 = vunpack.c.l.bf16 %v199
    %v207 = vunpack.c.h.bf16 %v199
    %v208 = vsub.f32 %v23, %v200
    %v209 = vsub.f32 %v24, %v201
    %v210 = vsub.f32 %v25, %v202
    %v211 = vsub.f32 %v26, %v203
    %v212 = vsub.f32 %v27, %v204
    %v213 = vsub.f32 %v28, %v205
    %v214 = vsub.f32 %v29, %v206
    %v215 = vsub.f32 %v30, %v207
    %v216 = vpack.c.bf16 %v209, %v208
    %v217 = vpack.c.bf16 %v211, %v210
    %v218 = vpack.c.bf16 %v213, %v212
    %v219 = vpack.c.bf16 %v215, %v214
    %vm220 = vcmask 523264
    %v222 = vsel %vm220, %v192, 0
    %224 = vmatprep.subr.bf16.mxu0 0
    %225 = vmatpush1.bf16.msra.mxu0 0
    %226 = vmatprep.subr.bf16.mxu0 0
    %227 = vmatpush1.bf16.msra.mxu0 0
    %228 = vmatprep.subr.bf16.mxu0 0
    %229 = vmatpush1.bf16.msra.mxu0 0
    %230 = vmatprep.subr.bf16.mxu0 0
    %231 = vmatpush1.bf16.msra.mxu0 0
    %232 = vmatprep.subr.bf16.mxu0 0
    %233 = vmatpush1.bf16.msra.mxu0 %v219
    %234 = vmatprep.subr.bf16.mxu0 0
    %235 = vmatpush1.bf16.msra.mxu0 %v218
    %236 = vmatprep.subr.bf16.mxu0 0
    %237 = vmatpush1.bf16.msra.mxu0 %v217
    %238 = vmatprep.subr.bf16.mxu0 0
    %239 = vmatpush1.bf16.msra.mxu0 %v216
    %240 = vmatprep.subr.bf16.mxu0 0
    %241 = vmatpush2.bf16.msra.mxu0 0
    %242 = vmatprep.subr.bf16.mxu0 0
    %243 = vmatpush2.bf16.msra.mxu0 0
    %244 = vmatprep.subr.bf16.mxu0 0
    %245 = vmatpush2.bf16.msra.mxu0 0
    %246 = vmatprep.subr.bf16.mxu0 0
    %247 = vmatpush2.bf16.msra.mxu0 0
    %248 = vmatprep.subr.bf16.mxu0 0
    %249 = vmatpush2.bf16.msra.mxu0 0
    %250 = vmatprep.subr.bf16.mxu0 0
    %251 = vmatpush2.bf16.msra.mxu0 0
    %252 = vmatprep.subr.bf16.mxu0 0
    %253 = vmatpush2.bf16.msra.mxu0 0
    %254 = vmatprep.subr.bf16.mxu0 0
    %255 = vmatpush2.bf16.msra.mxu0 0
    %256 = vmatprep.mubr.bf16.mxu0 0
    %257 = vmatmul.mubr.bf16.gmra.mxu0 %v222
    %v258 = vpop.f32.mrf.mxu0
    %v259 = vadd.f32 0.0, %v258
    %v260 = vpop.f32.mrf.mxu0
    %v261 = vpop.f32.mrf.mxu0
    %v262 = vpop.f32.mrf.mxu0
    %263 = vdwg.mxu0
    %264 = vmatprep.subr.bf16.mxu0 0
    %265 = vmatpush1.bf16.msra.mxu0 0
    %266 = vmatprep.subr.bf16.mxu0 0
    %267 = vmatpush1.bf16.msra.mxu0 0
    %268 = vmatprep.subr.bf16.mxu0 0
    %269 = vmatpush1.bf16.msra.mxu0 0
    %270 = vmatprep.subr.bf16.mxu0 0
    %271 = vmatpush1.bf16.msra.mxu0 0
    %272 = vmatprep.subr.bf16.mxu0 0
    %273 = vmatpush1.bf16.msra.mxu0 %v199
    %274 = vmatprep.subr.bf16.mxu0 0
    %275 = vmatpush1.bf16.msra.mxu0 %v198
    %276 = vmatprep.subr.bf16.mxu0 0
    %277 = vmatpush1.bf16.msra.mxu0 %v197
    %278 = vmatprep.subr.bf16.mxu0 0
    %279 = vmatpush1.bf16.msra.mxu0 %v196
    %280 = vmatprep.subr.bf16.mxu0 0
    %281 = vmatpush2.bf16.msra.mxu0 0
    %282 = vmatprep.subr.bf16.mxu0 0
    %283 = vmatpush2.bf16.msra.mxu0 0
    %284 = vmatprep.subr.bf16.mxu0 0
    %285 = vmatpush2.bf16.msra.mxu0 0
    %286 = vmatprep.subr.bf16.mxu0 0
    %287 = vmatpush2.bf16.msra.mxu0 0
    %288 = vmatprep.subr.bf16.mxu0 0
    %289 = vmatpush2.bf16.msra.mxu0 0
    %290 = vmatprep.subr.bf16.mxu0 0
    %291 = vmatpush2.bf16.msra.mxu0 0
    %292 = vmatprep.subr.bf16.mxu0 0
    %293 = vmatpush2.bf16.msra.mxu0 0
    %294 = vmatprep.subr.bf16.mxu0 0
    %295 = vmatpush2.bf16.msra.mxu0 0
    %296 = vmatprep.mubr.bf16.mxu0 0
    %297 = vmatmul.mubr.bf16.gmra.mxu0 %v222
    %v298 = vpop.f32.mrf.mxu0
    %v299 = vadd.f32 %v259, %v298
    %v300 = vpop.f32.mrf.mxu0
    %v301 = vpop.f32.mrf.mxu0
    %v302 = vpop.f32.mrf.mxu0
    %303 = vdwg.mxu0
    %v305 = vsel %vm220, %v195, 0
    %307 = vmatprep.subr.bf16.mxu0 0
    %308 = vmatpush1.bf16.msra.mxu0 0
    %309 = vmatprep.subr.bf16.mxu0 0
    %310 = vmatpush1.bf16.msra.mxu0 0
    %311 = vmatprep.subr.bf16.mxu0 0
    %312 = vmatpush1.bf16.msra.mxu0 0
    %313 = vmatprep.subr.bf16.mxu0 0
    %314 = vmatpush1.bf16.msra.mxu0 0
    %315 = vmatprep.subr.bf16.mxu0 0
    %316 = vmatpush1.bf16.msra.mxu0 %v199
    %317 = vmatprep.subr.bf16.mxu0 0
    %318 = vmatpush1.bf16.msra.mxu0 %v198
    %319 = vmatprep.subr.bf16.mxu0 0
    %320 = vmatpush1.bf16.msra.mxu0 %v197
    %321 = vmatprep.subr.bf16.mxu0 0
    %322 = vmatpush1.bf16.msra.mxu0 %v196
    %323 = vmatprep.subr.bf16.mxu0 0
    %324 = vmatpush2.bf16.msra.mxu0 0
    %325 = vmatprep.subr.bf16.mxu0 0
    %326 = vmatpush2.bf16.msra.mxu0 0
    %327 = vmatprep.subr.bf16.mxu0 0
    %328 = vmatpush2.bf16.msra.mxu0 0
    %329 = vmatprep.subr.bf16.mxu0 0
    %330 = vmatpush2.bf16.msra.mxu0 0
    %331 = vmatprep.subr.bf16.mxu0 0
    %332 = vmatpush2.bf16.msra.mxu0 0
    %333 = vmatprep.subr.bf16.mxu0 0
    %334 = vmatpush2.bf16.msra.mxu0 0
    %335 = vmatprep.subr.bf16.mxu0 0
    %336 = vmatpush2.bf16.msra.mxu0 0
    %337 = vmatprep.subr.bf16.mxu0 0
    %338 = vmatpush2.bf16.msra.mxu0 0
    %339 = vmatprep.mubr.bf16.mxu0 0
    %340 = vmatmul.mubr.bf16.gmra.mxu0 %v305
    %v341 = vpop.f32.mrf.mxu0
    %v342 = vadd.f32 0.0, %v341
    %v343 = vpop.f32.mrf.mxu0
    %v344 = vpop.f32.mrf.mxu0
    %v345 = vpop.f32.mrf.mxu0
    %346 = vdwg.mxu0
    %v347 = vadd.f32 %v299, %v342
    %v348 = vlaneseq
    %v349 = vshrl.u32 %v348, 7
    %v350 = vsub.s32 0, %v349
    %v351 = vrot.slane %v40, %v350
    %v352 = vadd.f32 %v347, %v351
    %v353 = vtanh.pop %v352
    %v354 = vpack.c.bf16 %v353, %v353
    %v355 = vunpack.c.l.bf16 %v354
    %v356 = vsub.f32 %v353, %v355
    %v357 = vpack.c.bf16 %v356, %v356
    %v358 = vpack.c.bf16 %v32, %v31
    %v359 = vpack.c.bf16 %v34, %v33
    %v360 = vpack.c.bf16 %v36, %v35
    %v361 = vpack.c.bf16 %v38, %v37
    %v362 = vunpack.c.l.bf16 %v358
    %v363 = vunpack.c.h.bf16 %v358
    %v364 = vunpack.c.l.bf16 %v359
    %v365 = vunpack.c.h.bf16 %v359
    %v366 = vunpack.c.l.bf16 %v360
    %v367 = vunpack.c.h.bf16 %v360
    %v368 = vunpack.c.l.bf16 %v361
    %v369 = vunpack.c.h.bf16 %v361
    %v370 = vsub.f32 %v31, %v362
    %v371 = vsub.f32 %v32, %v363
    %v372 = vsub.f32 %v33, %v364
    %v373 = vsub.f32 %v34, %v365
    %v374 = vsub.f32 %v35, %v366
    %v375 = vsub.f32 %v36, %v367
    %v376 = vsub.f32 %v37, %v368
    %v377 = vsub.f32 %v38, %v369
    %v378 = vpack.c.bf16 %v371, %v370
    %v379 = vpack.c.bf16 %v373, %v372
    %v380 = vpack.c.bf16 %v375, %v374
    %v381 = vpack.c.bf16 %v377, %v376
    %v383 = vsel %vm220, %v354, 0
    %385 = vmatprep.subr.bf16.mxu0 0
    %386 = vmatpush1.bf16.msra.mxu0 0
    %387 = vmatprep.subr.bf16.mxu0 0
    %388 = vmatpush1.bf16.msra.mxu0 0
    %389 = vmatprep.subr.bf16.mxu0 0
    %390 = vmatpush1.bf16.msra.mxu0 0
    %391 = vmatprep.subr.bf16.mxu0 0
    %392 = vmatpush1.bf16.msra.mxu0 0
    %393 = vmatprep.subr.bf16.mxu0 0
    %394 = vmatpush1.bf16.msra.mxu0 %v381
    %395 = vmatprep.subr.bf16.mxu0 0
    %396 = vmatpush1.bf16.msra.mxu0 %v380
    %397 = vmatprep.subr.bf16.mxu0 0
    %398 = vmatpush1.bf16.msra.mxu0 %v379
    %399 = vmatprep.subr.bf16.mxu0 0
    %400 = vmatpush1.bf16.msra.mxu0 %v378
    %401 = vmatprep.subr.bf16.mxu0 0
    %402 = vmatpush2.bf16.msra.mxu0 0
    %403 = vmatprep.subr.bf16.mxu0 0
    %404 = vmatpush2.bf16.msra.mxu0 0
    %405 = vmatprep.subr.bf16.mxu0 0
    %406 = vmatpush2.bf16.msra.mxu0 0
    %407 = vmatprep.subr.bf16.mxu0 0
    %408 = vmatpush2.bf16.msra.mxu0 0
    %409 = vmatprep.subr.bf16.mxu0 0
    %410 = vmatpush2.bf16.msra.mxu0 0
    %411 = vmatprep.subr.bf16.mxu0 0
    %412 = vmatpush2.bf16.msra.mxu0 0
    %413 = vmatprep.subr.bf16.mxu0 0
    %414 = vmatpush2.bf16.msra.mxu0 0
    %415 = vmatprep.subr.bf16.mxu0 0
    %416 = vmatpush2.bf16.msra.mxu0 0
    %417 = vmatprep.mubr.bf16.mxu0 0
    %418 = vmatmul.mubr.bf16.gmra.mxu0 %v383
    %v419 = vpop.f32.mrf.mxu0
    %v420 = vadd.f32 0.0, %v419
    %v421 = vpop.f32.mrf.mxu0
    %v422 = vpop.f32.mrf.mxu0
    %v423 = vpop.f32.mrf.mxu0
    %424 = vdwg.mxu0
    %425 = vmatprep.subr.bf16.mxu0 0
    %426 = vmatpush1.bf16.msra.mxu0 0
    %427 = vmatprep.subr.bf16.mxu0 0
    %428 = vmatpush1.bf16.msra.mxu0 0
    %429 = vmatprep.subr.bf16.mxu0 0
    %430 = vmatpush1.bf16.msra.mxu0 0
    %431 = vmatprep.subr.bf16.mxu0 0
    %432 = vmatpush1.bf16.msra.mxu0 0
    %433 = vmatprep.subr.bf16.mxu0 0
    %434 = vmatpush1.bf16.msra.mxu0 %v361
    %435 = vmatprep.subr.bf16.mxu0 0
    %436 = vmatpush1.bf16.msra.mxu0 %v360
    %437 = vmatprep.subr.bf16.mxu0 0
    %438 = vmatpush1.bf16.msra.mxu0 %v359
    %439 = vmatprep.subr.bf16.mxu0 0
    %440 = vmatpush1.bf16.msra.mxu0 %v358
    %441 = vmatprep.subr.bf16.mxu0 0
    %442 = vmatpush2.bf16.msra.mxu0 0
    %443 = vmatprep.subr.bf16.mxu0 0
    %444 = vmatpush2.bf16.msra.mxu0 0
    %445 = vmatprep.subr.bf16.mxu0 0
    %446 = vmatpush2.bf16.msra.mxu0 0
    %447 = vmatprep.subr.bf16.mxu0 0
    %448 = vmatpush2.bf16.msra.mxu0 0
    %449 = vmatprep.subr.bf16.mxu0 0
    %450 = vmatpush2.bf16.msra.mxu0 0
    %451 = vmatprep.subr.bf16.mxu0 0
    %452 = vmatpush2.bf16.msra.mxu0 0
    %453 = vmatprep.subr.bf16.mxu0 0
    %454 = vmatpush2.bf16.msra.mxu0 0
    %455 = vmatprep.subr.bf16.mxu0 0
    %456 = vmatpush2.bf16.msra.mxu0 0
    %457 = vmatprep.mubr.bf16.mxu0 0
    %458 = vmatmul.mubr.bf16.gmra.mxu0 %v383
    %v459 = vpop.f32.mrf.mxu0
    %v460 = vadd.f32 %v420, %v459
    %v461 = vpop.f32.mrf.mxu0
    %v462 = vpop.f32.mrf.mxu0
    %v463 = vpop.f32.mrf.mxu0
    %464 = vdwg.mxu0
    %v466 = vsel %vm220, %v357, 0
    %468 = vmatprep.subr.bf16.mxu0 0
    %469 = vmatpush1.bf16.msra.mxu0 0
    %470 = vmatprep.subr.bf16.mxu0 0
    %471 = vmatpush1.bf16.msra.mxu0 0
    %472 = vmatprep.subr.bf16.mxu0 0
    %473 = vmatpush1.bf16.msra.mxu0 0
    %474 = vmatprep.subr.bf16.mxu0 0
    %475 = vmatpush1.bf16.msra.mxu0 0
    %476 = vmatprep.subr.bf16.mxu0 0
    %477 = vmatpush1.bf16.msra.mxu0 %v361
    %478 = vmatprep.subr.bf16.mxu0 0
    %479 = vmatpush1.bf16.msra.mxu0 %v360
    %480 = vmatprep.subr.bf16.mxu0 0
    %481 = vmatpush1.bf16.msra.mxu0 %v359
    %482 = vmatprep.subr.bf16.mxu0 0
    %483 = vmatpush1.bf16.msra.mxu0 %v358
    %484 = vmatprep.subr.bf16.mxu0 0
    %485 = vmatpush2.bf16.msra.mxu0 0
    %486 = vmatprep.subr.bf16.mxu0 0
    %487 = vmatpush2.bf16.msra.mxu0 0
    %488 = vmatprep.subr.bf16.mxu0 0
    %489 = vmatpush2.bf16.msra.mxu0 0
    %490 = vmatprep.subr.bf16.mxu0 0
    %491 = vmatpush2.bf16.msra.mxu0 0
    %492 = vmatprep.subr.bf16.mxu0 0
    %493 = vmatpush2.bf16.msra.mxu0 0
    %494 = vmatprep.subr.bf16.mxu0 0
    %495 = vmatpush2.bf16.msra.mxu0 0
    %496 = vmatprep.subr.bf16.mxu0 0
    %497 = vmatpush2.bf16.msra.mxu0 0
    %498 = vmatprep.subr.bf16.mxu0 0
    %499 = vmatpush2.bf16.msra.mxu0 0
    %500 = vmatprep.mubr.bf16.mxu0 0
    %501 = vmatmul.mubr.bf16.gmra.mxu0 %v466
    %v502 = vpop.f32.mrf.mxu0
    %v503 = vadd.f32 0.0, %v502
    %v504 = vpop.f32.mrf.mxu0
    %v505 = vpop.f32.mrf.mxu0
    %v506 = vpop.f32.mrf.mxu0
    %507 = vdwg.mxu0
    %v508 = vadd.f32 %v460, %v503
    %v509 = vlaneseq
    %v510 = vshrl.u32 %v509, 7
    %v511 = vsub.s32 0, %v510
    %v512 = vrot.slane %v41, %v511
    %v513 = vadd.f32 %v508, %v512
    %v514 = vtanh.pop %v513
    %v515 = vld [vmem:[%s2] sm:$0xff]
    %v516 = vld [vmem:[%s2 + $0x8] sm:$0xff]
    %v517 = vld [vmem:[%s2 + $0x10] sm:$0xff]
    %v518 = vld [vmem:[%s2 + $0x18] sm:$0xff]
    %v519 = vld [vmem:[%s2 + $0x20] sm:$0xff]
    %v520 = vld [vmem:[%s2 + $0x28] sm:$0xff]
    %v521 = vld [vmem:[%s2 + $0x30] sm:$0xff]
    %v522 = vld [vmem:[%s2 + $0x38] sm:$0xff]
    %v523 = vpack.c.bf16 %v514, %v514
    %v524 = vunpack.c.l.bf16 %v523
    %v525 = vsub.f32 %v514, %v524
    %v526 = vpack.c.bf16 %v525, %v525
    %v527 = vpack.c.bf16 %v516, %v515
    %v528 = vpack.c.bf16 %v518, %v517
    %v529 = vpack.c.bf16 %v520, %v519
    %v530 = vpack.c.bf16 %v522, %v521
    %v531 = vunpack.c.l.bf16 %v527
    %v532 = vunpack.c.h.bf16 %v527
    %v533 = vunpack.c.l.bf16 %v528
    %v534 = vunpack.c.h.bf16 %v528
    %v535 = vunpack.c.l.bf16 %v529
    %v536 = vunpack.c.h.bf16 %v529
    %v537 = vunpack.c.l.bf16 %v530
    %v538 = vunpack.c.h.bf16 %v530
    %v539 = vsub.f32 %v515, %v531
    %v540 = vsub.f32 %v516, %v532
    %v541 = vsub.f32 %v517, %v533
    %v542 = vsub.f32 %v518, %v534
    %v543 = vsub.f32 %v519, %v535
    %v544 = vsub.f32 %v520, %v536
    %v545 = vsub.f32 %v521, %v537
    %v546 = vsub.f32 %v522, %v538
    %v547 = vpack.c.bf16 %v540, %v539
    %v548 = vpack.c.bf16 %v542, %v541
    %v549 = vpack.c.bf16 %v544, %v543
    %v550 = vpack.c.bf16 %v546, %v545
    %v552 = vsel %vm220, %v523, 0
    %554 = vmatprep.subr.bf16.mxu0 0
    %555 = vmatpush1.bf16.msra.mxu0 0
    %556 = vmatprep.subr.bf16.mxu0 0
    %557 = vmatpush1.bf16.msra.mxu0 0
    %558 = vmatprep.subr.bf16.mxu0 0
    %559 = vmatpush1.bf16.msra.mxu0 0
    %560 = vmatprep.subr.bf16.mxu0 0
    %561 = vmatpush1.bf16.msra.mxu0 0
    %562 = vmatprep.subr.bf16.mxu0 0
    %563 = vmatpush1.bf16.msra.mxu0 %v550
    %564 = vmatprep.subr.bf16.mxu0 0
    %565 = vmatpush1.bf16.msra.mxu0 %v549
    %566 = vmatprep.subr.bf16.mxu0 0
    %567 = vmatpush1.bf16.msra.mxu0 %v548
    %568 = vmatprep.subr.bf16.mxu0 0
    %569 = vmatpush1.bf16.msra.mxu0 %v547
    %570 = vmatprep.subr.bf16.mxu0 0
    %571 = vmatpush2.bf16.msra.mxu0 0
    %572 = vmatprep.subr.bf16.mxu0 0
    %573 = vmatpush2.bf16.msra.mxu0 0
    %574 = vmatprep.subr.bf16.mxu0 0
    %575 = vmatpush2.bf16.msra.mxu0 0
    %576 = vmatprep.subr.bf16.mxu0 0
    %577 = vmatpush2.bf16.msra.mxu0 0
    %578 = vmatprep.subr.bf16.mxu0 0
    %579 = vmatpush2.bf16.msra.mxu0 0
    %580 = vmatprep.subr.bf16.mxu0 0
    %581 = vmatpush2.bf16.msra.mxu0 0
    %582 = vmatprep.subr.bf16.mxu0 0
    %583 = vmatpush2.bf16.msra.mxu0 0
    %584 = vmatprep.subr.bf16.mxu0 0
    %585 = vmatpush2.bf16.msra.mxu0 0
    %586 = vmatprep.mubr.bf16.mxu0 0
    %587 = vmatmul.mubr.bf16.gmra.mxu0 %v552
    %v588 = vpop.f32.mrf.mxu0
    %v589 = vadd.f32 0.0, %v588
    %v590 = vpop.f32.mrf.mxu0
    %v591 = vpop.f32.mrf.mxu0
    %v592 = vpop.f32.mrf.mxu0
    %593 = vdwg.mxu0
    %594 = vmatprep.subr.bf16.mxu0 0
    %595 = vmatpush1.bf16.msra.mxu0 0
    %596 = vmatprep.subr.bf16.mxu0 0
    %597 = vmatpush1.bf16.msra.mxu0 0
    %598 = vmatprep.subr.bf16.mxu0 0
    %599 = vmatpush1.bf16.msra.mxu0 0
    %600 = vmatprep.subr.bf16.mxu0 0
    %601 = vmatpush1.bf16.msra.mxu0 0
    %602 = vmatprep.subr.bf16.mxu0 0
    %603 = vmatpush1.bf16.msra.mxu0 %v530
    %604 = vmatprep.subr.bf16.mxu0 0
    %605 = vmatpush1.bf16.msra.mxu0 %v529
    %606 = vmatprep.subr.bf16.mxu0 0
    %607 = vmatpush1.bf16.msra.mxu0 %v528
    %608 = vmatprep.subr.bf16.mxu0 0
    %609 = vmatpush1.bf16.msra.mxu0 %v527
    %610 = vmatprep.subr.bf16.mxu0 0
    %611 = vmatpush2.bf16.msra.mxu0 0
    %612 = vmatprep.subr.bf16.mxu0 0
    %613 = vmatpush2.bf16.msra.mxu0 0
    %614 = vmatprep.subr.bf16.mxu0 0
    %615 = vmatpush2.bf16.msra.mxu0 0
    %616 = vmatprep.subr.bf16.mxu0 0
    %617 = vmatpush2.bf16.msra.mxu0 0
    %618 = vmatprep.subr.bf16.mxu0 0
    %619 = vmatpush2.bf16.msra.mxu0 0
    %620 = vmatprep.subr.bf16.mxu0 0
    %621 = vmatpush2.bf16.msra.mxu0 0
    %622 = vmatprep.subr.bf16.mxu0 0
    %623 = vmatpush2.bf16.msra.mxu0 0
    %624 = vmatprep.subr.bf16.mxu0 0
    %625 = vmatpush2.bf16.msra.mxu0 0
    %626 = vmatprep.mubr.bf16.mxu0 0
    %627 = vmatmul.mubr.bf16.gmra.mxu0 %v552
    %v628 = vpop.f32.mrf.mxu0
    %v629 = vadd.f32 %v589, %v628
    %v630 = vpop.f32.mrf.mxu0
    %v631 = vpop.f32.mrf.mxu0
    %v632 = vpop.f32.mrf.mxu0
    %633 = vdwg.mxu0
    %v635 = vsel %vm220, %v526, 0
    %637 = vmatprep.subr.bf16.mxu0 0
    %638 = vmatpush1.bf16.msra.mxu0 0
    %639 = vmatprep.subr.bf16.mxu0 0
    %640 = vmatpush1.bf16.msra.mxu0 0
    %641 = vmatprep.subr.bf16.mxu0 0
    %642 = vmatpush1.bf16.msra.mxu0 0
    %643 = vmatprep.subr.bf16.mxu0 0
    %644 = vmatpush1.bf16.msra.mxu0 0
    %645 = vmatprep.subr.bf16.mxu0 0
    %646 = vmatpush1.bf16.msra.mxu0 %v530
    %647 = vmatprep.subr.bf16.mxu0 0
    %648 = vmatpush1.bf16.msra.mxu0 %v529
    %649 = vmatprep.subr.bf16.mxu0 0
    %650 = vmatpush1.bf16.msra.mxu0 %v528
    %651 = vmatprep.subr.bf16.mxu0 0
    %652 = vmatpush1.bf16.msra.mxu0 %v527
    %653 = vmatprep.subr.bf16.mxu0 0
    %654 = vmatpush2.bf16.msra.mxu0 0
    %655 = vmatprep.subr.bf16.mxu0 0
    %656 = vmatpush2.bf16.msra.mxu0 0
    %657 = vmatprep.subr.bf16.mxu0 0
    %658 = vmatpush2.bf16.msra.mxu0 0
    %659 = vmatprep.subr.bf16.mxu0 0
    %660 = vmatpush2.bf16.msra.mxu0 0
    %661 = vmatprep.subr.bf16.mxu0 0
    %662 = vmatpush2.bf16.msra.mxu0 0
    %663 = vmatprep.subr.bf16.mxu0 0
    %664 = vmatpush2.bf16.msra.mxu0 0
    %665 = vmatprep.subr.bf16.mxu0 0
    %666 = vmatpush2.bf16.msra.mxu0 0
    %667 = vmatprep.subr.bf16.mxu0 0
    %668 = vmatpush2.bf16.msra.mxu0 0
    %669 = vmatprep.mubr.bf16.mxu0 0
    %670 = vmatmul.mubr.bf16.gmra.mxu0 %v635
    %v671 = vpop.f32.mrf.mxu0
    %v672 = vadd.f32 0.0, %v671
    %v673 = vpop.f32.mrf.mxu0
    %v674 = vpop.f32.mrf.mxu0
    %v675 = vpop.f32.mrf.mxu0
    %676 = vdwg.mxu0
    %v677 = vadd.f32 %v629, %v672
    %v678 = vlaneseq
    %v679 = vshrl.u32 %v678, 7
    %v680 = vsub.s32 0, %v679
    %v681 = vrot.slane %v42, %v680
    %v682 = vadd.f32 %v677, %v681
    %684 = vrot.lane.b32.xlu0 %v682, 120
    %v685 = vpop.permute.xlu0 %684
    %v687 = vmax.f32 %v682, %v685
    %688 = vrot.lane.b32.xlu0 %v682, 112
    %v689 = vpop.permute.xlu0 %688
    %v691 = vmax.f32 %v687, %v689
    %692 = vrot.lane.b32.xlu0 %v682, 104
    %v693 = vpop.permute.xlu0 %692
    %v695 = vmax.f32 %v691, %v693
    %696 = vrot.lane.b32.xlu0 %v682, 96
    %v697 = vpop.permute.xlu0 %696
    %v699 = vmax.f32 %v695, %v697
    %v700 = vsub.f32 %v682, %v699
    %v701 = vmul.f32 %v700, 1.442695
    %v702 = vpow.pop %v701
    %704 = vrot.lane.b32.xlu0 %v699, 8
    %v705 = vpop.permute.xlu0 %704
    %v707 = vsub.f32 %v682, %v705
    %v708 = vmul.f32 %v707, 1.442695
    %v709 = vpow.pop %v708
    %710 = vrot.lane.b32.xlu0 %v699, 16
    %v711 = vpop.permute.xlu0 %710
    %v713 = vsub.f32 %v682, %v711
    %v714 = vmul.f32 %v713, 1.442695
    %v715 = vpow.pop %v714
    %716 = vrot.lane.b32.xlu0 %v699, 24
    %v717 = vpop.permute.xlu0 %716
    %v719 = vsub.f32 %v682, %v717
    %v720 = vmul.f32 %v719, 1.442695
    %v721 = vpow.pop %v720
    %722 = vrot.lane.b32.xlu0 %v699, 32
    %v723 = vpop.permute.xlu0 %722
    %v725 = vsub.f32 %v682, %v723
    %v726 = vmul.f32 %v725, 1.442695
    %v727 = vpow.pop %v726
    %729 = vrot.lane.b32.xlu0 %v709, 120
    %v730 = vpop.permute.xlu0 %729
    %v732 = vadd.f32 %v702, %v730
    %734 = vrot.lane.b32.xlu0 %v715, 112
    %v735 = vpop.permute.xlu0 %734
    %v737 = vadd.f32 %v732, %v735
    %739 = vrot.lane.b32.xlu0 %v721, 104
    %v740 = vpop.permute.xlu0 %739
    %v742 = vadd.f32 %v737, %v740
    %744 = vrot.lane.b32.xlu0 %v727, 96
    %v745 = vpop.permute.xlu0 %744
    %v747 = vadd.f32 %v742, %v745
    %v748 = vrcp.pop %v747
    %v749 = vmul.f32 %v747, %v748
    %v750 = vsub.f32 2.0, %v749
    %v751 = vmul.f32 %v748, %v750
    %v752 = vmul.f32 %v702, %v751
    %754 = vrot.lane.b32.xlu0 %v751, 8
    %v755 = vpop.permute.xlu0 %754
    %v757 = vmul.f32 %v709, %v755
    %758 = vrot.lane.b32.xlu0 %v751, 16
    %v759 = vpop.permute.xlu0 %758
    %v761 = vmul.f32 %v715, %v759
    %762 = vrot.lane.b32.xlu0 %v751, 24
    %v763 = vpop.permute.xlu0 %762
    %v765 = vmul.f32 %v721, %v763
    %766 = vrot.lane.b32.xlu0 %v751, 32
    %v767 = vpop.permute.xlu0 %766
    %v769 = vmul.f32 %v727, %v767
    %v770 = vmul.f32 %v752, 6.0
    %v771 = vmul.f32 %v757, 6.0
    %v772 = vmul.f32 %v761, 6.0
    %v773 = vmul.f32 %v765, 6.0
    %v774 = vmul.f32 %v769, 6.0
    %v775 = vmax.f32 %v682, 0.0
    %v776 = vand.u32 2147483647, %v682
    %v777 = vsub.f32 0.0, %v776
    %v778 = vmul.f32 %v777, 1.442695
    %v779 = vpow.pop %v778
    %v780 = vadd.f32 %v779, 1.0
    %v781 = vlog2.pop %v780
    %v782 = vmul.f32 %v781, 0.6931472
    %v783 = vadd.f32 %v775, %v782
    %785 = vrot.lane.b32.xlu0 %v771, 120
    %v786 = vpop.permute.xlu0 %785
    %v788 = vmax.f32 %v770, %v786
    %790 = vrot.lane.b32.xlu0 %v772, 112
    %v791 = vpop.permute.xlu0 %790
    %v793 = vmax.f32 %v788, %v791
    %795 = vrot.lane.b32.xlu0 %v773, 104
    %v796 = vpop.permute.xlu0 %795
    %v798 = vmax.f32 %v793, %v796
    %800 = vrot.lane.b32.xlu0 %v774, 96
    %v801 = vpop.permute.xlu0 %800
    %v803 = vmax.f32 %v798, %v801
    %v804 = vsub.f32 %v770, %v803
    %v805 = vmul.f32 %v804, 1.442695
    %v806 = vpow.pop %v805
    %808 = vrot.lane.b32.xlu0 %v803, 8
    %v809 = vpop.permute.xlu0 %808
    %v811 = vsub.f32 %v771, %v809
    %v812 = vmul.f32 %v811, 1.442695
    %v813 = vpow.pop %v812
    %814 = vrot.lane.b32.xlu0 %v803, 16
    %v815 = vpop.permute.xlu0 %814
    %v817 = vsub.f32 %v772, %v815
    %v818 = vmul.f32 %v817, 1.442695
    %v819 = vpow.pop %v818
    %820 = vrot.lane.b32.xlu0 %v803, 24
    %v821 = vpop.permute.xlu0 %820
    %v823 = vsub.f32 %v773, %v821
    %v824 = vmul.f32 %v823, 1.442695
    %v825 = vpow.pop %v824
    %826 = vrot.lane.b32.xlu0 %v803, 32
    %v827 = vpop.permute.xlu0 %826
    %v829 = vsub.f32 %v774, %v827
    %v830 = vmul.f32 %v829, 1.442695
    %v831 = vpow.pop %v830
    %833 = vrot.lane.b32.xlu0 %v813, 120
    %v834 = vpop.permute.xlu0 %833
    %v836 = vadd.f32 %v806, %v834
    %838 = vrot.lane.b32.xlu0 %v819, 112
    %v839 = vpop.permute.xlu0 %838
    %v841 = vadd.f32 %v836, %v839
    %843 = vrot.lane.b32.xlu0 %v825, 104
    %v844 = vpop.permute.xlu0 %843
    %v846 = vadd.f32 %v841, %v844
    %848 = vrot.lane.b32.xlu0 %v831, 96
    %v849 = vpop.permute.xlu0 %848
    %v851 = vadd.f32 %v846, %v849
    %v852 = vrcp.pop %v851
    %v853 = vmul.f32 %v851, %v852
    %v854 = vsub.f32 2.0, %v853
    %v855 = vmul.f32 %v852, %v854
    %v856 = vmul.f32 %v806, %v855
    %858 = vrot.lane.b32.xlu0 %v855, 8
    %v859 = vpop.permute.xlu0 %858
    %v861 = vmul.f32 %v813, %v859
    %862 = vrot.lane.b32.xlu0 %v855, 16
    %v863 = vpop.permute.xlu0 %862
    %v865 = vmul.f32 %v819, %v863
    %866 = vrot.lane.b32.xlu0 %v855, 24
    %v867 = vpop.permute.xlu0 %866
    %v869 = vmul.f32 %v825, %v867
    %v870 = vmul.f32 %v856, 0.995
    %v871 = vadd.f32 %v870, 0.001
    %v872 = vmul.f32 %v861, 0.995
    %v873 = vadd.f32 %v872, 0.001
    %v874 = vmul.f32 %v865, 0.995
    %v875 = vadd.f32 %v874, 0.001
    %v876 = vmul.f32 %v869, 0.995
    %v877 = vadd.f32 %v876, 0.001
    %v878 = vadd.f32 %v871, 0.0
    %v879 = vmul.f32 %v878, 6.0
    %v880 = vadd.f32 %v879, -3.0
    %882 = vrot.lane.b32.xlu0 %v873, 120
    %v883 = vpop.permute.xlu0 %882
    %v885 = vadd.f32 %v878, %v883
    %v886 = vmul.f32 %v885, 6.0
    %v887 = vadd.f32 %v886, -3.0
    %889 = vrot.lane.b32.xlu0 %v875, 112
    %v890 = vpop.permute.xlu0 %889
    %v892 = vadd.f32 %v885, %v890
    %v893 = vmul.f32 %v892, 6.0
    %v894 = vadd.f32 %v893, -3.0
    %896 = vrot.lane.b32.xlu0 %v877, 104
    %v897 = vpop.permute.xlu0 %896
    %v899 = vadd.f32 %v892, %v897
    %v900 = vmul.f32 %v899, 6.0
    %v901 = vadd.f32 %v900, -3.0
    %v902 = vsub.f32 %v880, -3.0
    %v903 = vsub.f32 %v887, %v880
    %v904 = vsub.f32 %v894, %v887
    %v905 = vsub.f32 %v901, %v894
    %v906 = vsub.f32 3.0, %v901
    %v907 = vmax.f32 %v783, 0.0
    %v908 = vand.u32 2147483647, %v783
    %v909 = vsub.f32 0.0, %v908
    %v910 = vmul.f32 %v909, 1.442695
    %v911 = vpow.pop %v910
    %v912 = vadd.f32 %v911, 1.0
    %v913 = vlog2.pop %v912
    %v914 = vmul.f32 %v913, 0.6931472
    %v915 = vadd.f32 %v907, %v914
    %v916 = vadd.f32 %v915, 0.001
    %v917 = vmax.f32 %v21, -3.0
    %v918 = vmin.f32 %v917, 3.0
    %vm919 = vcmp.ge.f32.partialorder %v918, -3.0
    %vm920 = vcmp.lt.f32.partialorder %v918, %v880
    %vm921 = vmand %vm919, %vm920
    %v922 = vsel %vm921, 1, 0
    %v923 = vcvt.s32.f32 %v922
    %v924 = vmul.f32 %v923, -3.0
    %v925 = vadd.f32 %v924, 0.0
    %v926 = vmul.f32 %v923, %v902
    %v927 = vadd.f32 %v926, 0.0
    %929 = vrot.lane.b32.xlu0 %v902, 88
    %v930 = vpop.permute.xlu0 %929
    %v932 = vmul.f32 %v923, %v930
    %v933 = vadd.f32 %v932, 0.0
    %v934 = vadd.f32 %v923, 0.0
    %936 = vrot.lane.b32.xlu0 %v916, 48
    %v937 = vpop.permute.xlu0 %936
    %v939 = vmul.f32 %v923, %v937
    %v940 = vadd.f32 %v939, 0.0
    %vm941 = vcmp.ge.f32.partialorder %v918, %v880
    %vm942 = vcmp.lt.f32.partialorder %v918, %v887
    %vm943 = vmand %vm941, %vm942
    %v944 = vsel %vm943, 1, 0
    %v945 = vcvt.s32.f32 %v944
    %v946 = vmul.f32 %v945, %v880
    %v947 = vadd.f32 %v925, %v946
    %v948 = vmul.f32 %v945, %v903
    %v949 = vadd.f32 %v927, %v948
    %951 = vrot.lane.b32.xlu0 %v880, 88
    %v952 = vpop.permute.xlu0 %951
    %v954 = vmul.f32 %v945, %v952
    %v955 = vadd.f32 %v925, %v954
    %957 = vrot.lane.b32.xlu0 %v903, 88
    %v958 = vpop.permute.xlu0 %957
    %v960 = vmul.f32 %v945, %v958
    %v961 = vadd.f32 %v933, %v960
    %v962 = vmul.f32 %v945, %v937
    %v963 = vadd.f32 %v934, %v962
    %964 = vrot.lane.b32.xlu0 %v916, 40
    %v965 = vpop.permute.xlu0 %964
    %v967 = vmul.f32 %v945, %v965
    %v968 = vadd.f32 %v940, %v967
    %vm969 = vcmp.ge.f32.partialorder %v918, %v887
    %vm970 = vcmp.lt.f32.partialorder %v918, %v894
    %vm971 = vmand %vm969, %vm970
    %v972 = vsel %vm971, 1, 0
    %v973 = vcvt.s32.f32 %v972
    %v974 = vmul.f32 %v973, %v887
    %v975 = vadd.f32 %v947, %v974
    %v976 = vmul.f32 %v973, %v904
    %v977 = vadd.f32 %v949, %v976
    %979 = vrot.lane.b32.xlu0 %v887, 88
    %v980 = vpop.permute.xlu0 %979
    %v982 = vmul.f32 %v973, %v980
    %v983 = vadd.f32 %v955, %v982
    %985 = vrot.lane.b32.xlu0 %v904, 88
    %v986 = vpop.permute.xlu0 %985
    %v988 = vmul.f32 %v973, %v986
    %v989 = vadd.f32 %v961, %v988
    %v990 = vmul.f32 %v973, %v965
    %v991 = vadd.f32 %v963, %v990
    %992 = vrot.lane.b32.xlu0 %v916, 32
    %v993 = vpop.permute.xlu0 %992
    %v995 = vmul.f32 %v973, %v993
    %v996 = vadd.f32 %v968, %v995
    %vm997 = vcmp.ge.f32.partialorder %v918, %v894
    %vm998 = vcmp.lt.f32.partialorder %v918, %v901
    %vm999 = vmand %vm997, %vm998
    %v1000 = vsel %vm999, 1, 0
    %v1001 = vcvt.s32.f32 %v1000
    %v1002 = vmul.f32 %v1001, %v894
    %v1003 = vadd.f32 %v975, %v1002
    %v1004 = vmul.f32 %v1001, %v905
    %v1005 = vadd.f32 %v977, %v1004
    %1007 = vrot.lane.b32.xlu0 %v894, 88
    %v1008 = vpop.permute.xlu0 %1007
    %v1010 = vmul.f32 %v1001, %v1008
    %v1011 = vadd.f32 %v983, %v1010
    %1013 = vrot.lane.b32.xlu0 %v905, 88
    %v1014 = vpop.permute.xlu0 %1013
    %v1016 = vmul.f32 %v1001, %v1014
    %v1017 = vadd.f32 %v989, %v1016
    %v1018 = vmul.f32 %v1001, %v993
    %v1019 = vadd.f32 %v991, %v1018
    %1020 = vrot.lane.b32.xlu0 %v916, 24
    %v1021 = vpop.permute.xlu0 %1020
    %v1023 = vmul.f32 %v1001, %v1021
    %v1024 = vadd.f32 %v996, %v1023
    %vm1025 = vcmp.ge.f32.partialorder %v918, %v901
    %vm1026 = vcmp.lt.f32.partialorder %v918, 3.000001
    %vm1027 = vmand %vm1025, %vm1026
    %v1028 = vsel %vm1027, 1, 0
    %v1029 = vcvt.s32.f32 %v1028
    %v1030 = vmul.f32 %v1029, %v901
    %v1031 = vadd.f32 %v1003, %v1030
    %v1032 = vmul.f32 %v1029, %v906
    %v1033 = vadd.f32 %v1005, %v1032
    %1035 = vrot.lane.b32.xlu0 %v901, 88
    %v1036 = vpop.permute.xlu0 %1035
    %v1038 = vmul.f32 %v1029, %v1036
    %v1039 = vadd.f32 %v1011, %v1038
    %1041 = vrot.lane.b32.xlu0 %v906, 88
    %v1042 = vpop.permute.xlu0 %1041
    %v1044 = vmul.f32 %v1029, %v1042
    %v1045 = vadd.f32 %v1017, %v1044
    %v1046 = vmul.f32 %v1029, %v1021
    %v1047 = vadd.f32 %v1019, %v1046
    %v1048 = vadd.f32 %v1024, %v1029
    %v1049 = vrcp.pop %v1033
    %v1050 = vmul.f32 %v1033, %v1049
    %v1051 = vsub.f32 2.0, %v1050
    %v1052 = vmul.f32 %v1049, %v1051
    %v1053 = vmul.f32 %v1045, %v1052
    %v1054 = vsub.f32 %v918, %v1031
    %v1055 = vmul.f32 %v1054, %v1052
    %v1056 = vsub.f32 1.0, %v1055
    %v1057 = vmul.f32 %v1055, %v1056
    %v1058 = vmul.f32 %v1055, %v1055
    %v1059 = vmul.f32 %v1053, %v1058
    %v1060 = vmul.f32 %v1047, %v1057
    %v1061 = vadd.f32 %v1059, %v1060
    %v1062 = vmul.f32 %v1045, %v1061
    %v1063 = vadd.f32 %v1047, %v1048
    %v1064 = vmul.f32 %v1053, 2.0
    %v1065 = vsub.f32 %v1063, %v1064
    %v1066 = vmul.f32 %v1065, %v1057
    %v1067 = vadd.f32 %v1053, %v1066
    %v1068 = vrcp.pop %v1067
    %v1069 = vmul.f32 %v1067, %v1068
    %v1070 = vsub.f32 2.0, %v1069
    %v1071 = vmul.f32 %v1068, %v1070
    %v1072 = vmul.f32 %v1062, %v1071
    %v1073 = vadd.f32 %v1039, %v1072
    %v1074 = vmul.f32 %v1053, %v1053
    %v1075 = vmul.f32 %v1048, %v1058
    %v1076 = vmul.f32 %v1064, %v1057
    %v1077 = vadd.f32 %v1075, %v1076
    %v1078 = vmul.f32 %v1047, %v1056
    %v1079 = vmul.f32 %v1078, %v1056
    %v1080 = vadd.f32 %v1077, %v1079
    %v1081 = vmul.f32 %v1074, %v1080
    %v1082 = vmul.f32 %v1071, %v1071
    %v1083 = vmul.f32 %v1081, %v1082
    %v1084 = vlog2.pop %v1083
    %v1085 = vmul.f32 %v1084, 0.6931472
    %vm1086 = vcmp.ge.f32.partialorder %v21, -3.0
    %vm1087 = vcmp.le.f32.partialorder %v21, 3.0
    %vm1088 = vmand %vm1086, %vm1087
    %v1089 = vsel %vm1088, %v1073, %v21
    %v1090 = vsel %vm1088, %v1085, 0.0
    %1091 = vst.msk [vmem:[#allocation2] sm:$0xff] %vm51, %v1089
    %v1092 = vsel %vm51, %v1090, 0.0
    %1093 = vadd.xlane.f32.xlu0 %v1092
    %v1094 = vpop.xlane.xlu0 %1093
    %vm1095 = vcmask 7168
    %1096 = vst.msk [vmem:[%s5] sm:$0xff] %vm1095, %v1094
    // Predicated region
    $region18: #{tpu_custom_call.1} parent=1 // pred_check
      _
    $region19: #{tpu_custom_call.1} parent=1 // pred_check_branch
      %1098 = sbr.rel (0) target = $region21
    $region20: #{tpu_custom_call.1} parent=1 // pred_region
      %s1100 = ssub.s32 128, 128
      %1101 = vsyncadd [#allocation3], %s1100
      %s1103 = sshll.u32 [#allocation2], 4
      %s1104 = int_to_ptr.vmem [resolvable:$true] %s1103
      %1106 = dma.vmem_to_hbm [thread:$0]  %s1104, 128, %s4, [#allocation3]
    $region21: #{tpu_custom_call.1} parent=1 // pred_fallthru
      _
    // Predicated region
    $region22: #{tpu_custom_call.1} parent=1 // pred_check
      _
    $region23: #{tpu_custom_call.1} parent=1 // pred_check_branch
      %1108 = sbr.rel (0) target = $region25
    $region24: #{tpu_custom_call.1} parent=1 // pred_region
      _
    $region25: #{tpu_custom_call.1} parent=1 // pred_fallthru
      _
    // Predicated region
    $region26: #{tpu_custom_call.1} parent=1 // pred_check
      _
    $region27: #{tpu_custom_call.1} parent=1 // pred_check_branch
      %1110 = sbr.rel (0) target = $region29
    $region28: #{tpu_custom_call.1} parent=1 // pred_region
      %1111 = dma.done [#allocation3], 128
    $region29: #{tpu_custom_call.1} parent=1 // pred_fallthru
      _
    // Predicated region
    $region30: #{tpu_custom_call.1} parent=1 // pred_check
      _
    $region31: #{tpu_custom_call.1} parent=1 // pred_check_branch
      %1113 = sbr.rel (0) target = $region33
    $region32: #{tpu_custom_call.1} parent=1 // pred_region
      _
    $region33: #{tpu_custom_call.1} parent=1 // pred_fallthru
      _
    %1114 = vsyncpa [#allocation3], 1

</llo_original>
